<compile_context>
chip_gen: v7x
topology: tpu7x:2x2x1
jax: 0.10.0
libtpu: 0.0.40
codegen_flags: <defaults>
</compile_context>

<pallas_src>
import functools

import jax
import jax.numpy as jnp
from jax.experimental import pallas as pl
from jax.experimental.pallas import tpu as pltpu

EXPANSION = 4            # BottleNeck.expansion
LANES = 128              # TPU lane width -> channel padding target
VMEM_LIMIT = 32 * 1024 * 1024


# ------------------------------ small helpers ------------------------------

def _round_up(x, m):
    return (x + m - 1) // m * m


def _pick_tm(m, cap=512):
    """Row-tile size: big tiles when possible, whole (8-aligned) array if small."""
    return cap if m >= cap else _round_up(m, 8)


def _pad2d(a, rows, cols):
    return jnp.pad(a, ((0, rows - a.shape[0]), (0, cols - a.shape[1])))


# ------------------------------ Pallas kernels ------------------------------

def _pact_quant(y, q_ref, row=0):
    # q_ref (SMEM f32[r,3]); q_ref[row] = [alpha, (2^a-1)/alpha, alpha/(2^a-1)]
    y = jnp.clip(y, 0.0, q_ref[row, 0])
    return jnp.round(y * q_ref[row, 1]) * q_ref[row, 2]


def _fused_conv12_kernel(x_ref, w1_ref, b1_ref, w2_ref, b2_ref, q_ref,
                         o_ref, ypad_ref, acc_ref, *, stride, h, w, wp):
    # One batch image per grid step.
    #   x_ref   : (H*W, Cin_p)   bf16, flattened NHWC image
    #   ypad_ref: (Lin, Cmid_p)  f32 scratch = spatially padded conv1 output
    #   acc_ref : (Mo,  Cmid_p)  f32 accumulator for the 3x3 conv
    #
    # ---- conv1 (1x1) + BN + PactReLU, entirely on-chip -----------------
    ypad_ref[...] = jnp.zeros_like(ypad_ref)
    y1 = jnp.dot(x_ref[...], w1_ref[...], preferred_element_type=jnp.float32)
    y1 = _pact_quant(y1 + b1_ref[...], q_ref, 0)
    # Scatter image rows into the zero-padded flattened layout (pad=1).
    for hh in range(h):
        ypad_ref[pl.ds((hh + 1) * wp + 1, w), :] = y1[hh * w:(hh + 1) * w, :]

    # ---- conv2 (3x3, pad=1, stride) + BN + PactReLU ---------------------
    # For flattened output row g = oh*Wp + ow:
    #   out[g] = sum_{dy,dx} ypad[stride*g + dy*Wp + dx] @ W2[dy,dx]
    # (columns ow >= Wo produce garbage rows that the wrapper discards).
    mo = acc_ref.shape[0]
    for k in range(9):
        dy, dx = divmod(k, 3)
        off = dy * wp + dx
        if stride == 1:
            slab = ypad_ref[pl.ds(off, mo), :]
        else:
            slab = ypad_ref[pl.ds(off, mo, stride=stride), :]
        contrib = jnp.dot(slab.astype(jnp.bfloat16), w2_ref[k],
                          preferred_element_type=jnp.float32)
        if k == 0:
            acc_ref[...] = contrib
        else:
            acc_ref[...] += contrib
    y2 = acc_ref[...] + b2_ref[...]
    o_ref[...] = _pact_quant(y2, q_ref, 1).astype(o_ref.dtype)


def _tail_conv_shortcut_kernel(y2_ref, w3_ref, b3_ref, xs_ref, ws_ref, bs_ref,
                               q_ref, o_ref):
    # Fused: conv3 (1x1) + BN  +  shortcut conv (1x1 strided) + BN
    #        + residual add + final PactReLU.
    r = jnp.dot(y2_ref[...], w3_ref[...], preferred_element_type=jnp.float32)
    s = jnp.dot(xs_ref[...], ws_ref[...], preferred_element_type=jnp.float32)
    y = r + s + (b3_ref[...] + bs_ref[...])
    o_ref[...] = _pact_quant(y, q_ref).astype(o_ref.dtype)


def _tail_identity_kernel(y2_ref, w3_ref, b3_ref, xs_ref, q_ref, o_ref):
    # Fused: conv3 (1x1) + BN + identity shortcut + final PactReLU.
    r = jnp.dot(y2_ref[...], w3_ref[...], preferred_element_type=jnp.float32)
    r = r + b3_ref[...] + xs_ref[...].astype(jnp.float32)
    o_ref[...] = _pact_quant(r, q_ref).astype(o_ref.dtype)


# --------------------------- pallas_call wrappers ---------------------------

def _compiler_params():
    return pltpu.CompilerParams(dimension_semantics=("parallel",),
                                vmem_limit_bytes=VMEM_LIMIT)


_SMEM_SPEC = pl.BlockSpec(memory_space=pltpu.MemorySpace.SMEM)


def conv12_fused(x3, w1, b1, w2, b2, qp, *, stride, h, w, wp, lin, mo,
                 out_dtype):
    nimg, hw, cin_p = x3.shape
    cmid_p = w1.shape[1]
    kern = functools.partial(_fused_conv12_kernel, stride=stride, h=h, w=w,
                             wp=wp)
    return pl.pallas_call(
        kern,
        out_shape=jax.ShapeDtypeStruct((nimg, mo, cmid_p), out_dtype),
        grid=(nimg,),
        in_specs=[
            pl.BlockSpec((None, hw, cin_p), lambda n_: (n_, 0, 0)),
            pl.BlockSpec((cin_p, cmid_p), lambda n_: (0, 0)),
            pl.BlockSpec((1, cmid_p), lambda n_: (0, 0)),
            pl.BlockSpec((9, cmid_p, cmid_p), lambda n_: (0, 0, 0)),
            pl.BlockSpec((1, cmid_p), lambda n_: (0, 0)),
            _SMEM_SPEC,
        ],
        out_specs=pl.BlockSpec((None, mo, cmid_p), lambda n_: (n_, 0, 0)),
        scratch_shapes=[pltpu.VMEM((lin, cmid_p), jnp.float32),
                        pltpu.VMEM((mo, cmid_p), jnp.float32)],
        compiler_params=_compiler_params(),
    )(x3, w1, b1, w2, b2, qp)


def tail_conv_shortcut(y2, w3, b3, xs, ws, bs, qp, *, tm):
    mp, kr = y2.shape
    _, cop = w3.shape
    _, ks = xs.shape
    return pl.pallas_call(
        _tail_conv_shortcut_kernel,
        out_shape=jax.ShapeDtypeStruct((mp, cop), jnp.float32),
        grid=(mp // tm,),
        in_specs=[
            pl.BlockSpec((tm, kr), lambda i: (i, 0)),
            pl.BlockSpec((kr, cop), lambda i: (0, 0)),
            pl.BlockSpec((1, cop), lambda i: (0, 0)),
            pl.BlockSpec((tm, ks), lambda i: (i, 0)),
            pl.BlockSpec((ks, cop), lambda i: (0, 0)),
            pl.BlockSpec((1, cop), lambda i: (0, 0)),
            _SMEM_SPEC,
        ],
        out_specs=pl.BlockSpec((tm, cop), lambda i: (i, 0)),
        compiler_params=_compiler_params(),
    )(y2, w3, b3, xs, ws, bs, qp)


def tail_identity(y2, w3, b3, xs, qp, *, tm):
    mp, kr = y2.shape
    _, cop = w3.shape
    return pl.pallas_call(
        _tail_identity_kernel,
        out_shape=jax.ShapeDtypeStruct((mp, cop), jnp.float32),
        grid=(mp // tm,),
        in_specs=[
            pl.BlockSpec((tm, kr), lambda i: (i, 0)),
            pl.BlockSpec((kr, cop), lambda i: (0, 0)),
            pl.BlockSpec((1, cop), lambda i: (0, 0)),
            pl.BlockSpec((tm, cop), lambda i: (i, 0)),
            _SMEM_SPEC,
        ],
        out_specs=pl.BlockSpec((tm, cop), lambda i: (i, 0)),
        compiler_params=_compiler_params(),
    )(y2, w3, b3, xs, qp)


# ------------------------------- glue (JAX) --------------------------------

def dorefa_weight_quant(w, w_bit):
    """Standard DoReFa-Net weight quantization (eps-guarded)."""
    if w_bit >= 32:
        return w
    n = float(2 ** w_bit - 1)
    wt = jnp.tanh(w)
    wt = wt / (2.0 * jnp.maximum(jnp.max(jnp.abs(wt)), 1e-8)) + 0.5
    return 2.0 * (jnp.round(wt * n) / n) - 1.0


def fold_bn(gamma, beta, mean, var, eps=1e-5):
    scale = gamma / jnp.sqrt(var + eps)
    return scale, beta - mean * scale


def init_params(key, in_channels, out_channels):
    """Deterministic parameter init (shapes follow BottleNeck.__init__)."""
    co_exp = out_channels * EXPANSION
    keys = jax.random.split(key, 8)

    def conv_w(k, cout, cin, ksz):
        fan_in = cin * ksz * ksz
        return jax.random.normal(k, (cout, cin, ksz, ksz), jnp.float32) / jnp.sqrt(fan_in)

    def bn(k, c):
        k1, k2, k3, k4 = jax.random.split(k, 4)
        return dict(gamma=jax.random.uniform(k1, (c,), minval=0.5, maxval=1.5),
                    beta=0.1 * jax.random.normal(k2, (c,)),
                    mean=0.1 * jax.random.normal(k3, (c,)),
                    var=jax.random.uniform(k4, (c,), minval=0.5, maxval=1.5))

    return dict(
        w1=conv_w(keys[0], out_channels, in_channels, 1),
        bn1=bn(keys[1], out_channels),
        alpha1=jnp.array([6.0], jnp.float32),
        w2=conv_w(keys[2], out_channels, out_channels, 3),
        bn2=bn(keys[3], out_channels),
        alpha2=jnp.array([6.0], jnp.float32),
        w3=conv_w(keys[4], co_exp, out_channels, 1),
        bn3=bn(keys[5], co_exp),
        ws=conv_w(keys[6], co_exp, in_channels, 1),
        bns=bn(keys[7], co_exp),
        alpha_out=jnp.array([6.0], jnp.float32),
    )


def bottleneck_forward(x_nchw, params, *, stride, w_bit, a_bit):
    N, Cin, H, W = x_nchw.shape
    Cmid = params['w1'].shape[0]
    Cout = params['w3'].shape[0]
    Cin_p, Cmid_p, Cout_p = (_round_up(c, LANES) for c in (Cin, Cmid, Cout))

    n_levels = float(2 ** a_bit - 1)

    def qparams(alpha):
        a = alpha.reshape(()).astype(jnp.float32)
        return jnp.stack([a, n_levels / a, a / n_levels]).reshape(1, 3)

    x = jnp.transpose(x_nchw, (0, 2, 3, 1)).astype(jnp.float32)      # NCHW->NHWC
    if Cin_p != Cin:
        x = jnp.pad(x, ((0, 0), (0, 0), (0, 0), (0, Cin_p - Cin)))

    # ---- weights: DoReFa quantize, fold BN scale, lane-pad, cast bf16 ------
    s1, b1 = fold_bn(**params['bn1'])
    w1q = dorefa_weight_quant(params['w1'], w_bit)[:, :, 0, 0]       # (Cmid,Cin)
    w1m = _pad2d((w1q * s1[:, None]).T, Cin_p, Cmid_p).astype(jnp.bfloat16)
    b1m = _pad2d(b1[None, :].astype(jnp.float32), 1, Cmid_p)

    s2, b2 = fold_bn(**params['bn2'])
    w2q = dorefa_weight_quant(params['w2'], w_bit)                   # (Cmid,Cmid,3,3)
    w2m = jnp.transpose(w2q * s2[:, None, None, None], (2, 3, 1, 0)) # (3,3,ci,co)
    w2m = w2m.reshape(9, Cmid, Cmid)
    w2m = jnp.pad(w2m, ((0, 0), (0, Cmid_p - Cmid), (0, Cmid_p - Cmid)))
    w2m = w2m.astype(jnp.bfloat16)
    b2m = _pad2d(b2[None, :].astype(jnp.float32), 1, Cmid_p)

    s3, b3 = fold_bn(**params['bn3'])
    w3q = dorefa_weight_quant(params['w3'], w_bit)[:, :, 0, 0]       # (Cout,Cmid)
    w3m = _pad2d((w3q * s3[:, None]).T, Cmid_p, Cout_p).astype(jnp.bfloat16)
    b3m = _pad2d(b3[None, :].astype(jnp.float32), 1, Cout_p)

    # ---- conv1 (1x1)+BN+PACT fused with conv2 (3x3, stride, pad=1)+BN+PACT --
    # y1 never touches HBM: it is computed and spatially padded inside the
    # per-image kernel, then consumed by nine shifted MXU matmuls.
    Hp, Wp = H + 2, W + 2
    Ho = (H + 2 - 3) // stride + 1
    Wo = (W + 2 - 3) // stride + 1
    Mo = Ho * Wp                                  # flattened rows incl. pad cols
    Lin = _round_up(max(Hp * Wp, stride * (Mo - 1) + 2 * Wp + 3), 8)
    x3 = x.reshape(N, H * W, Cin_p).astype(jnp.bfloat16)
    q12 = jnp.concatenate([qparams(params['alpha1']),
                           qparams(params['alpha2'])], axis=0)       # (2,3) SMEM
    y2f = conv12_fused(x3, w1m, b1m, w2m, b2m, q12, stride=stride,
                       h=H, w=W, wp=Wp, lin=Lin, mo=Mo,
                       out_dtype=jnp.bfloat16)
    y2 = y2f.reshape(N, Ho, Wp, Cmid_p)[:, :, :Wo, :].reshape(N * Ho * Wo, Cmid_p)

    # ---- conv3 + shortcut + residual add + final PactReLU (one kernel) -----
    M2 = N * Ho * Wo
    TM2 = _pick_tm(M2)
    M2p = _round_up(M2, TM2)
    if M2p != M2:
        y2 = jnp.pad(y2, ((0, M2p - M2), (0, 0)))

    if stride != 1 or Cin != Cout:
        ss, bs = fold_bn(**params['bns'])
        wsq = dorefa_weight_quant(params['ws'], w_bit)[:, :, 0, 0]   # (Cout,Cin)
        wsm = _pad2d((wsq * ss[:, None]).T, Cin_p, Cout_p).astype(jnp.bfloat16)
        bsm = _pad2d(bs[None, :].astype(jnp.float32), 1, Cout_p)
        # TODO(synk): the strided shortcut gather is a single small XLA slice;
        # it could be folded into the fused tail kernel via manual DMA.
        xs = x[:, ::stride, ::stride, :].reshape(M2, Cin_p)
        if M2p != M2:
            xs = jnp.pad(xs, ((0, M2p - M2), (0, 0)))
        out = tail_conv_shortcut(y2, w3m, b3m, xs.astype(jnp.bfloat16), wsm,
                                 bsm, qparams(params['alpha_out']), tm=TM2)
    else:
        xs = x.reshape(M2, Cout_p)                # identity: Cin == Cout here
        if M2p != M2:
            xs = jnp.pad(xs, ((0, M2p - M2), (0, 0)))
        out = tail_identity(y2, w3m, b3m, xs, qparams(params['alpha_out']),
                            tm=TM2)

    out = out[:M2, :Cout].reshape(N, Ho, Wo, Cout)
    return jnp.transpose(out, (0, 3, 1, 2))                          # NHWC->NCHW


if __name__ == "__main__":
    key = jax.random.PRNGKey(0)
    kx, kp = jax.random.split(key)

    # Small shapes consistent with the module: NCHW input.
    N, Cin, H, W = 2, 16, 8, 8
    out_channels, stride = 8, 2
    w_bit, a_bit = 4, 4

    x = jax.random.normal(kx, (N, Cin, H, W), jnp.float32)
    params = init_params(kp, Cin, out_channels)

    fwd = jax.jit(functools.partial(bottleneck_forward,
                                    stride=stride, w_bit=w_bit, a_bit=a_bit))
    y = fwd(x, params)
    jax.block_until_ready(y)

    assert y.shape == (N, out_channels * EXPANSION, H // stride, W // stride), y.shape
    assert bool(jnp.all(jnp.isfinite(y)))
    print("KERNEL_OK")
</pallas_src>

<mosaic_0001>
module attributes {stable_mosaic.version = 11 : i64} {
  func.func @_fused_conv12_kernel(%arg0: i32, %arg1: memref<1x64x128xbf16, #tpu.memory_space<vmem>>, %arg2: memref<128x128xbf16, #tpu.memory_space<vmem>>, %arg3: memref<1x128xf32, #tpu.memory_space<vmem>>, %arg4: memref<9x128x128xbf16, #tpu.memory_space<vmem>>, %arg5: memref<1x128xf32, #tpu.memory_space<vmem>>, %arg6: memref<2x3xf32, #tpu.memory_space<smem>>, %arg7: memref<1x40x128xbf16, #tpu.memory_space<vmem>>, %arg8: memref<104x128xf32, #tpu.memory_space<vmem>>, %arg9: memref<40x128xf32, #tpu.memory_space<vmem>>) attributes {dimension_semantics = [#tpu.dimension_semantics<parallel>], iteration_bounds = array<i64: 2>, scalar_prefetch = 0 : i64, scratch_operands = 2 : i64, tpu.core_type = #tpu.core_type<tc>, window_params = [{transform_indices = @transform_0, window_bounds = array<i64: 1, 64, 128>}, {pipeline_mode = #tpu.pipeline_mode<synchronous>, transform_indices = @transform_1, window_bounds = array<i64: 128, 128>}, {pipeline_mode = #tpu.pipeline_mode<synchronous>, transform_indices = @transform_2, window_bounds = array<i64: 1, 128>}, {pipeline_mode = #tpu.pipeline_mode<synchronous>, transform_indices = @transform_3, window_bounds = array<i64: 9, 128, 128>}, {pipeline_mode = #tpu.pipeline_mode<synchronous>, transform_indices = @transform_4, window_bounds = array<i64: 1, 128>}, {transform_indices = @transform_5, window_bounds = array<i64: 2, 3>}, {transform_indices = @transform_6, window_bounds = array<i64: 1, 40, 128>}]} {
    %cst = arith.constant 0.000000e+00 : f32
    %0 = vector.broadcast %cst : f32 to vector<104x128xf32>
    %c0 = arith.constant 0 : index
    %c0_0 = arith.constant 0 : index
    %1 = vector.load %arg8[%c0, %c0_0] : memref<104x128xf32, #tpu.memory_space<vmem>>, vector<104x128xf32>
    tpu.vector_store %arg8[%c0, %c0_0], %0 {strides = array<i32>} : memref<104x128xf32, #tpu.memory_space<vmem>>, vector<104x128xf32>,
    %c0_1 = arith.constant 0 : index
    %c0_2 = arith.constant 0 : index
    %c0_3 = arith.constant 0 : index
    %2 = vector.load %arg1[%c0_1, %c0_2, %c0_3] : memref<1x64x128xbf16, #tpu.memory_space<vmem>>, vector<1x64x128xbf16>
    %3 = vector.shape_cast %2 : vector<1x64x128xbf16> to vector<64x128xbf16>
    %c0_4 = arith.constant 0 : index
    %c0_5 = arith.constant 0 : index
    %4 = vector.load %arg2[%c0_4, %c0_5] : memref<128x128xbf16, #tpu.memory_space<vmem>>, vector<128x128xbf16>
    %cst_6 = arith.constant dense<0.000000e+00> : vector<64x128xf32>
    %5 = tpu.matmul %3, %4, %cst_6 {dimension_numbers = #tpu.dot_dimension_numbers<[1], [0], [0], [1], [0, 0, 1, 1], [], []>} : vector<64x128xbf16>, vector<128x128xbf16>, vector<64x128xf32> -> vector<64x128xf32>
    %c0_7 = arith.constant 0 : index
    %c0_8 = arith.constant 0 : index
    %6 = vector.load %arg3[%c0_7, %c0_8] : memref<1x128xf32, #tpu.memory_space<vmem>>, vector<1x128xf32>
    %7 = vector.broadcast %6 : vector<1x128xf32> to vector<64x128xf32>
    %8 = arith.addf %5, %7 : vector<64x128xf32>
    %c0_9 = arith.constant 0 : index
    %c0_10 = arith.constant 0 : index
    %9 = memref.load %arg6[%c0_9, %c0_10] : memref<2x3xf32, #tpu.memory_space<smem>>
    %cst_11 = arith.constant 0.000000e+00 : f32
    %10 = vector.broadcast %cst_11 : f32 to vector<64x128xf32>
    %11 = arith.maximumf %10, %8 : vector<64x128xf32>
    %12 = vector.broadcast %9 : f32 to vector<64x128xf32>
    %13 = arith.minimumf %12, %11 : vector<64x128xf32>
    %c0_12 = arith.constant 0 : index
    %c1 = arith.constant 1 : index
    %14 = memref.load %arg6[%c0_12, %c1] : memref<2x3xf32, #tpu.memory_space<smem>>
    %15 = vector.broadcast %14 : f32 to vector<64x128xf32>
    %16 = arith.mulf %13, %15 : vector<64x128xf32>
    %17 = math.roundeven %16 : vector<64x128xf32>
    %c0_13 = arith.constant 0 : index
    %c2 = arith.constant 2 : index
    %18 = memref.load %arg6[%c0_13, %c2] : memref<2x3xf32, #tpu.memory_space<smem>>
    %19 = vector.broadcast %18 : f32 to vector<64x128xf32>
    %20 = arith.mulf %17, %19 : vector<64x128xf32>
    %21 = vector.extract_strided_slice %20 {offsets = [0, 0], sizes = [8, 128], strides = [1, 1]} : vector<64x128xf32> to vector<8x128xf32>
    %c11 = arith.constant 11 : index
    %c0_14 = arith.constant 0 : index
    %22 = vector.load %arg8[%c11, %c0_14] : memref<104x128xf32, #tpu.memory_space<vmem>>, vector<8x128xf32>
    tpu.vector_store %arg8[%c11, %c0_14], %21 {strides = array<i32>} : memref<104x128xf32, #tpu.memory_space<vmem>>, vector<8x128xf32>,
    %23 = vector.extract_strided_slice %20 {offsets = [8, 0], sizes = [8, 128], strides = [1, 1]} : vector<64x128xf32> to vector<8x128xf32>
    %c21 = arith.constant 21 : index
    %c0_15 = arith.constant 0 : index
    %24 = vector.load %arg8[%c21, %c0_15] : memref<104x128xf32, #tpu.memory_space<vmem>>, vector<8x128xf32>
    tpu.vector_store %arg8[%c21, %c0_15], %23 {strides = array<i32>} : memref<104x128xf32, #tpu.memory_space<vmem>>, vector<8x128xf32>,
    %25 = vector.extract_strided_slice %20 {offsets = [16, 0], sizes = [8, 128], strides = [1, 1]} : vector<64x128xf32> to vector<8x128xf32>
    %c31 = arith.constant 31 : index
    %c0_16 = arith.constant 0 : index
    %26 = vector.load %arg8[%c31, %c0_16] : memref<104x128xf32, #tpu.memory_space<vmem>>, vector<8x128xf32>
    tpu.vector_store %arg8[%c31, %c0_16], %25 {strides = array<i32>} : memref<104x128xf32, #tpu.memory_space<vmem>>, vector<8x128xf32>,
    %27 = vector.extract_strided_slice %20 {offsets = [24, 0], sizes = [8, 128], strides = [1, 1]} : vector<64x128xf32> to vector<8x128xf32>
    %c41 = arith.constant 41 : index
    %c0_17 = arith.constant 0 : index
    %28 = vector.load %arg8[%c41, %c0_17] : memref<104x128xf32, #tpu.memory_space<vmem>>, vector<8x128xf32>
    tpu.vector_store %arg8[%c41, %c0_17], %27 {strides = array<i32>} : memref<104x128xf32, #tpu.memory_space<vmem>>, vector<8x128xf32>,
    %29 = vector.extract_strided_slice %20 {offsets = [32, 0], sizes = [8, 128], strides = [1, 1]} : vector<64x128xf32> to vector<8x128xf32>
    %c51 = arith.constant 51 : index
    %c0_18 = arith.constant 0 : index
    %30 = vector.load %arg8[%c51, %c0_18] : memref<104x128xf32, #tpu.memory_space<vmem>>, vector<8x128xf32>
    tpu.vector_store %arg8[%c51, %c0_18], %29 {strides = array<i32>} : memref<104x128xf32, #tpu.memory_space<vmem>>, vector<8x128xf32>,
    %31 = vector.extract_strided_slice %20 {offsets = [40, 0], sizes = [8, 128], strides = [1, 1]} : vector<64x128xf32> to vector<8x128xf32>
    %c61 = arith.constant 61 : index
    %c0_19 = arith.constant 0 : index
    %32 = vector.load %arg8[%c61, %c0_19] : memref<104x128xf32, #tpu.memory_space<vmem>>, vector<8x128xf32>
    tpu.vector_store %arg8[%c61, %c0_19], %31 {strides = array<i32>} : memref<104x128xf32, #tpu.memory_space<vmem>>, vector<8x128xf32>,
    %33 = vector.extract_strided_slice %20 {offsets = [48, 0], sizes = [8, 128], strides = [1, 1]} : vector<64x128xf32> to vector<8x128xf32>
    %c71 = arith.constant 71 : index
    %c0_20 = arith.constant 0 : index
    %34 = vector.load %arg8[%c71, %c0_20] : memref<104x128xf32, #tpu.memory_space<vmem>>, vector<8x128xf32>
    tpu.vector_store %arg8[%c71, %c0_20], %33 {strides = array<i32>} : memref<104x128xf32, #tpu.memory_space<vmem>>, vector<8x128xf32>,
    %35 = vector.extract_strided_slice %20 {offsets = [56, 0], sizes = [8, 128], strides = [1, 1]} : vector<64x128xf32> to vector<8x128xf32>
    %c81 = arith.constant 81 : index
    %c0_21 = arith.constant 0 : index
    %36 = vector.load %arg8[%c81, %c0_21] : memref<104x128xf32, #tpu.memory_space<vmem>>, vector<8x128xf32>
    tpu.vector_store %arg8[%c81, %c0_21], %35 {strides = array<i32>} : memref<104x128xf32, #tpu.memory_space<vmem>>, vector<8x128xf32>,
    %c0_22 = arith.constant 0 : index
    %c0_23 = arith.constant 0 : index
    %37 = tpu.strided_load %arg8[%c0_22, %c0_23] {strides = array<i32: 2, 1>} : memref<104x128xf32, #tpu.memory_space<vmem>>, vector<40x128xf32>
    %38 = arith.truncf %37 : vector<40x128xf32> to vector<40x128xbf16>
    %c0_24 = arith.constant 0 : index
    %c0_25 = arith.constant 0 : index
    %c0_26 = arith.constant 0 : index
    %39 = vector.load %arg4[%c0_24, %c0_25, %c0_26] : memref<9x128x128xbf16, #tpu.memory_space<vmem>>, vector<1x128x128xbf16>
    %40 = vector.shape_cast %39 : vector<1x128x128xbf16> to vector<128x128xbf16>
    %cst_27 = arith.constant dense<0.000000e+00> : vector<40x128xf32>
    %41 = tpu.matmul %38, %40, %cst_27 {dimension_numbers = #tpu.dot_dimension_numbers<[1], [0], [0], [1], [0, 0, 1, 1], [], []>} : vector<40x128xbf16>, vector<128x128xbf16>, vector<40x128xf32> -> vector<40x128xf32>
    %c0_28 = arith.constant 0 : index
    %c0_29 = arith.constant 0 : index
    %42 = vector.load %arg9[%c0_28, %c0_29] : memref<40x128xf32, #tpu.memory_space<vmem>>, vector<40x128xf32>
    tpu.vector_store %arg9[%c0_28, %c0_29], %41 {strides = array<i32>} : memref<40x128xf32, #tpu.memory_space<vmem>>, vector<40x128xf32>,
    %c1_30 = arith.constant 1 : index
    %c0_31 = arith.constant 0 : index
    %43 = tpu.strided_load %arg8[%c1_30, %c0_31] {strides = array<i32: 2, 1>} : memref<104x128xf32, #tpu.memory_space<vmem>>, vector<40x128xf32>
    %44 = arith.truncf %43 : vector<40x128xf32> to vector<40x128xbf16>
    %c1_32 = arith.constant 1 : index
    %c0_33 = arith.constant 0 : index
    %c0_34 = arith.constant 0 : index
    %45 = vector.load %arg4[%c1_32, %c0_33, %c0_34] : memref<9x128x128xbf16, #tpu.memory_space<vmem>>, vector<1x128x128xbf16>
    %46 = vector.shape_cast %45 : vector<1x128x128xbf16> to vector<128x128xbf16>
    %cst_35 = arith.constant dense<0.000000e+00> : vector<40x128xf32>
    %47 = tpu.matmul %44, %46, %cst_35 {dimension_numbers = #tpu.dot_dimension_numbers<[1], [0], [0], [1], [0, 0, 1, 1], [], []>} : vector<40x128xbf16>, vector<128x128xbf16>, vector<40x128xf32> -> vector<40x128xf32>
    %c0_36 = arith.constant 0 : index
    %c0_37 = arith.constant 0 : index
    %48 = vector.load %arg9[%c0_36, %c0_37] : memref<40x128xf32, #tpu.memory_space<vmem>>, vector<40x128xf32>
    %49 = arith.addf %48, %47 : vector<40x128xf32>
    %c0_38 = arith.constant 0 : index
    %c0_39 = arith.constant 0 : index
    %50 = vector.load %arg9[%c0_38, %c0_39] : memref<40x128xf32, #tpu.memory_space<vmem>>, vector<40x128xf32>
    tpu.vector_store %arg9[%c0_38, %c0_39], %49 {strides = array<i32>} : memref<40x128xf32, #tpu.memory_space<vmem>>, vector<40x128xf32>,
    %c2_40 = arith.constant 2 : index
    %c0_41 = arith.constant 0 : index
    %51 = tpu.strided_load %arg8[%c2_40, %c0_41] {strides = array<i32: 2, 1>} : memref<104x128xf32, #tpu.memory_space<vmem>>, vector<40x128xf32>
    %52 = arith.truncf %51 : vector<40x128xf32> to vector<40x128xbf16>
    %c2_42 = arith.constant 2 : index
    %c0_43 = arith.constant 0 : index
    %c0_44 = arith.constant 0 : index
    %53 = vector.load %arg4[%c2_42, %c0_43, %c0_44] : memref<9x128x128xbf16, #tpu.memory_space<vmem>>, vector<1x128x128xbf16>
    %54 = vector.shape_cast %53 : vector<1x128x128xbf16> to vector<128x128xbf16>
    %cst_45 = arith.constant dense<0.000000e+00> : vector<40x128xf32>
    %55 = tpu.matmul %52, %54, %cst_45 {dimension_numbers = #tpu.dot_dimension_numbers<[1], [0], [0], [1], [0, 0, 1, 1], [], []>} : vector<40x128xbf16>, vector<128x128xbf16>, vector<40x128xf32> -> vector<40x128xf32>
    %c0_46 = arith.constant 0 : index
    %c0_47 = arith.constant 0 : index
    %56 = vector.load %arg9[%c0_46, %c0_47] : memref<40x128xf32, #tpu.memory_space<vmem>>, vector<40x128xf32>
    %57 = arith.addf %56, %55 : vector<40x128xf32>
    %c0_48 = arith.constant 0 : index
    %c0_49 = arith.constant 0 : index
    %58 = vector.load %arg9[%c0_48, %c0_49] : memref<40x128xf32, #tpu.memory_space<vmem>>, vector<40x128xf32>
    tpu.vector_store %arg9[%c0_48, %c0_49], %57 {strides = array<i32>} : memref<40x128xf32, #tpu.memory_space<vmem>>, vector<40x128xf32>,
    %c10 = arith.constant 10 : index
    %c0_50 = arith.constant 0 : index
    %59 = tpu.strided_load %arg8[%c10, %c0_50] {strides = array<i32: 2, 1>} : memref<104x128xf32, #tpu.memory_space<vmem>>, vector<40x128xf32>
    %60 = arith.truncf %59 : vector<40x128xf32> to vector<40x128xbf16>
    %c3 = arith.constant 3 : index
    %c0_51 = arith.constant 0 : index
    %c0_52 = arith.constant 0 : index
    %61 = vector.load %arg4[%c3, %c0_51, %c0_52] : memref<9x128x128xbf16, #tpu.memory_space<vmem>>, vector<1x128x128xbf16>
    %62 = vector.shape_cast %61 : vector<1x128x128xbf16> to vector<128x128xbf16>
    %cst_53 = arith.constant dense<0.000000e+00> : vector<40x128xf32>
    %63 = tpu.matmul %60, %62, %cst_53 {dimension_numbers = #tpu.dot_dimension_numbers<[1], [0], [0], [1], [0, 0, 1, 1], [], []>} : vector<40x128xbf16>, vector<128x128xbf16>, vector<40x128xf32> -> vector<40x128xf32>
    %c0_54 = arith.constant 0 : index
    %c0_55 = arith.constant 0 : index
    %64 = vector.load %arg9[%c0_54, %c0_55] : memref<40x128xf32, #tpu.memory_space<vmem>>, vector<40x128xf32>
    %65 = arith.addf %64, %63 : vector<40x128xf32>
    %c0_56 = arith.constant 0 : index
    %c0_57 = arith.constant 0 : index
    %66 = vector.load %arg9[%c0_56, %c0_57] : memref<40x128xf32, #tpu.memory_space<vmem>>, vector<40x128xf32>
    tpu.vector_store %arg9[%c0_56, %c0_57], %65 {strides = array<i32>} : memref<40x128xf32, #tpu.memory_space<vmem>>, vector<40x128xf32>,
    %c11_58 = arith.constant 11 : index
    %c0_59 = arith.constant 0 : index
    %67 = tpu.strided_load %arg8[%c11_58, %c0_59] {strides = array<i32: 2, 1>} : memref<104x128xf32, #tpu.memory_space<vmem>>, vector<40x128xf32>
    %68 = arith.truncf %67 : vector<40x128xf32> to vector<40x128xbf16>
    %c4 = arith.constant 4 : index
    %c0_60 = arith.constant 0 : index
    %c0_61 = arith.constant 0 : index
    %69 = vector.load %arg4[%c4, %c0_60, %c0_61] : memref<9x128x128xbf16, #tpu.memory_space<vmem>>, vector<1x128x128xbf16>
    %70 = vector.shape_cast %69 : vector<1x128x128xbf16> to vector<128x128xbf16>
    %cst_62 = arith.constant dense<0.000000e+00> : vector<40x128xf32>
    %71 = tpu.matmul %68, %70, %cst_62 {dimension_numbers = #tpu.dot_dimension_numbers<[1], [0], [0], [1], [0, 0, 1, 1], [], []>} : vector<40x128xbf16>, vector<128x128xbf16>, vector<40x128xf32> -> vector<40x128xf32>
    %c0_63 = arith.constant 0 : index
    %c0_64 = arith.constant 0 : index
    %72 = vector.load %arg9[%c0_63, %c0_64] : memref<40x128xf32, #tpu.memory_space<vmem>>, vector<40x128xf32>
    %73 = arith.addf %72, %71 : vector<40x128xf32>
    %c0_65 = arith.constant 0 : index
    %c0_66 = arith.constant 0 : index
    %74 = vector.load %arg9[%c0_65, %c0_66] : memref<40x128xf32, #tpu.memory_space<vmem>>, vector<40x128xf32>
    tpu.vector_store %arg9[%c0_65, %c0_66], %73 {strides = array<i32>} : memref<40x128xf32, #tpu.memory_space<vmem>>, vector<40x128xf32>,
    %c12 = arith.constant 12 : index
    %c0_67 = arith.constant 0 : index
    %75 = tpu.strided_load %arg8[%c12, %c0_67] {strides = array<i32: 2, 1>} : memref<104x128xf32, #tpu.memory_space<vmem>>, vector<40x128xf32>
    %76 = arith.truncf %75 : vector<40x128xf32> to vector<40x128xbf16>
    %c5 = arith.constant 5 : index
    %c0_68 = arith.constant 0 : index
    %c0_69 = arith.constant 0 : index
    %77 = vector.load %arg4[%c5, %c0_68, %c0_69] : memref<9x128x128xbf16, #tpu.memory_space<vmem>>, vector<1x128x128xbf16>
    %78 = vector.shape_cast %77 : vector<1x128x128xbf16> to vector<128x128xbf16>
    %cst_70 = arith.constant dense<0.000000e+00> : vector<40x128xf32>
    %79 = tpu.matmul %76, %78, %cst_70 {dimension_numbers = #tpu.dot_dimension_numbers<[1], [0], [0], [1], [0, 0, 1, 1], [], []>} : vector<40x128xbf16>, vector<128x128xbf16>, vector<40x128xf32> -> vector<40x128xf32>
    %c0_71 = arith.constant 0 : index
    %c0_72 = arith.constant 0 : index
    %80 = vector.load %arg9[%c0_71, %c0_72] : memref<40x128xf32, #tpu.memory_space<vmem>>, vector<40x128xf32>
    %81 = arith.addf %80, %79 : vector<40x128xf32>
    %c0_73 = arith.constant 0 : index
    %c0_74 = arith.constant 0 : index
    %82 = vector.load %arg9[%c0_73, %c0_74] : memref<40x128xf32, #tpu.memory_space<vmem>>, vector<40x128xf32>
    tpu.vector_store %arg9[%c0_73, %c0_74], %81 {strides = array<i32>} : memref<40x128xf32, #tpu.memory_space<vmem>>, vector<40x128xf32>,
    %c20 = arith.constant 20 : index
    %c0_75 = arith.constant 0 : index
    %83 = tpu.strided_load %arg8[%c20, %c0_75] {strides = array<i32: 2, 1>} : memref<104x128xf32, #tpu.memory_space<vmem>>, vector<40x128xf32>
    %84 = arith.truncf %83 : vector<40x128xf32> to vector<40x128xbf16>
    %c6 = arith.constant 6 : index
    %c0_76 = arith.constant 0 : index
    %c0_77 = arith.constant 0 : index
    %85 = vector.load %arg4[%c6, %c0_76, %c0_77] : memref<9x128x128xbf16, #tpu.memory_space<vmem>>, vector<1x128x128xbf16>
    %86 = vector.shape_cast %85 : vector<1x128x128xbf16> to vector<128x128xbf16>
    %cst_78 = arith.constant dense<0.000000e+00> : vector<40x128xf32>
    %87 = tpu.matmul %84, %86, %cst_78 {dimension_numbers = #tpu.dot_dimension_numbers<[1], [0], [0], [1], [0, 0, 1, 1], [], []>} : vector<40x128xbf16>, vector<128x128xbf16>, vector<40x128xf32> -> vector<40x128xf32>
    %c0_79 = arith.constant 0 : index
    %c0_80 = arith.constant 0 : index
    %88 = vector.load %arg9[%c0_79, %c0_80] : memref<40x128xf32, #tpu.memory_space<vmem>>, vector<40x128xf32>
    %89 = arith.addf %88, %87 : vector<40x128xf32>
    %c0_81 = arith.constant 0 : index
    %c0_82 = arith.constant 0 : index
    %90 = vector.load %arg9[%c0_81, %c0_82] : memref<40x128xf32, #tpu.memory_space<vmem>>, vector<40x128xf32>
    tpu.vector_store %arg9[%c0_81, %c0_82], %89 {strides = array<i32>} : memref<40x128xf32, #tpu.memory_space<vmem>>, vector<40x128xf32>,
    %c21_83 = arith.constant 21 : index
    %c0_84 = arith.constant 0 : index
    %91 = tpu.strided_load %arg8[%c21_83, %c0_84] {strides = array<i32: 2, 1>} : memref<104x128xf32, #tpu.memory_space<vmem>>, vector<40x128xf32>
    %92 = arith.truncf %91 : vector<40x128xf32> to vector<40x128xbf16>
    %c7 = arith.constant 7 : index
    %c0_85 = arith.constant 0 : index
    %c0_86 = arith.constant 0 : index
    %93 = vector.load %arg4[%c7, %c0_85, %c0_86] : memref<9x128x128xbf16, #tpu.memory_space<vmem>>, vector<1x128x128xbf16>
    %94 = vector.shape_cast %93 : vector<1x128x128xbf16> to vector<128x128xbf16>
    %cst_87 = arith.constant dense<0.000000e+00> : vector<40x128xf32>
    %95 = tpu.matmul %92, %94, %cst_87 {dimension_numbers = #tpu.dot_dimension_numbers<[1], [0], [0], [1], [0, 0, 1, 1], [], []>} : vector<40x128xbf16>, vector<128x128xbf16>, vector<40x128xf32> -> vector<40x128xf32>
    %c0_88 = arith.constant 0 : index
    %c0_89 = arith.constant 0 : index
    %96 = vector.load %arg9[%c0_88, %c0_89] : memref<40x128xf32, #tpu.memory_space<vmem>>, vector<40x128xf32>
    %97 = arith.addf %96, %95 : vector<40x128xf32>
    %c0_90 = arith.constant 0 : index
    %c0_91 = arith.constant 0 : index
    %98 = vector.load %arg9[%c0_90, %c0_91] : memref<40x128xf32, #tpu.memory_space<vmem>>, vector<40x128xf32>
    tpu.vector_store %arg9[%c0_90, %c0_91], %97 {strides = array<i32>} : memref<40x128xf32, #tpu.memory_space<vmem>>, vector<40x128xf32>,
    %c22 = arith.constant 22 : index
    %c0_92 = arith.constant 0 : index
    %99 = tpu.strided_load %arg8[%c22, %c0_92] {strides = array<i32: 2, 1>} : memref<104x128xf32, #tpu.memory_space<vmem>>, vector<40x128xf32>
    %100 = arith.truncf %99 : vector<40x128xf32> to vector<40x128xbf16>
    %c8 = arith.constant 8 : index
    %c0_93 = arith.constant 0 : index
    %c0_94 = arith.constant 0 : index
    %101 = vector.load %arg4[%c8, %c0_93, %c0_94] : memref<9x128x128xbf16, #tpu.memory_space<vmem>>, vector<1x128x128xbf16>
    %102 = vector.shape_cast %101 : vector<1x128x128xbf16> to vector<128x128xbf16>
    %cst_95 = arith.constant dense<0.000000e+00> : vector<40x128xf32>
    %103 = tpu.matmul %100, %102, %cst_95 {dimension_numbers = #tpu.dot_dimension_numbers<[1], [0], [0], [1], [0, 0, 1, 1], [], []>} : vector<40x128xbf16>, vector<128x128xbf16>, vector<40x128xf32> -> vector<40x128xf32>
    %c0_96 = arith.constant 0 : index
    %c0_97 = arith.constant 0 : index
    %104 = vector.load %arg9[%c0_96, %c0_97] : memref<40x128xf32, #tpu.memory_space<vmem>>, vector<40x128xf32>
    %105 = arith.addf %104, %103 : vector<40x128xf32>
    %c0_98 = arith.constant 0 : index
    %c0_99 = arith.constant 0 : index
    %106 = vector.load %arg9[%c0_98, %c0_99] : memref<40x128xf32, #tpu.memory_space<vmem>>, vector<40x128xf32>
    tpu.vector_store %arg9[%c0_98, %c0_99], %105 {strides = array<i32>} : memref<40x128xf32, #tpu.memory_space<vmem>>, vector<40x128xf32>,
    %c0_100 = arith.constant 0 : index
    %c0_101 = arith.constant 0 : index
    %107 = vector.load %arg9[%c0_100, %c0_101] : memref<40x128xf32, #tpu.memory_space<vmem>>, vector<40x128xf32>
    %c0_102 = arith.constant 0 : index
    %c0_103 = arith.constant 0 : index
    %108 = vector.load %arg5[%c0_102, %c0_103] : memref<1x128xf32, #tpu.memory_space<vmem>>, vector<1x128xf32>
    %109 = vector.broadcast %108 : vector<1x128xf32> to vector<40x128xf32>
    %110 = arith.addf %107, %109 : vector<40x128xf32>
    %c1_104 = arith.constant 1 : index
    %c0_105 = arith.constant 0 : index
    %111 = memref.load %arg6[%c1_104, %c0_105] : memref<2x3xf32, #tpu.memory_space<smem>>
    %cst_106 = arith.constant 0.000000e+00 : f32
    %112 = vector.broadcast %cst_106 : f32 to vector<40x128xf32>
    %113 = arith.maximumf %112, %110 : vector<40x128xf32>
    %114 = vector.broadcast %111 : f32 to vector<40x128xf32>
    %115 = arith.minimumf %114, %113 : vector<40x128xf32>
    %c1_107 = arith.constant 1 : index
    %c1_108 = arith.constant 1 : index
    %116 = memref.load %arg6[%c1_107, %c1_108] : memref<2x3xf32, #tpu.memory_space<smem>>
    %117 = vector.broadcast %116 : f32 to vector<40x128xf32>
    %118 = arith.mulf %115, %117 : vector<40x128xf32>
    %119 = math.roundeven %118 : vector<40x128xf32>
    %c1_109 = arith.constant 1 : index
    %c2_110 = arith.constant 2 : index
    %120 = memref.load %arg6[%c1_109, %c2_110] : memref<2x3xf32, #tpu.memory_space<smem>>
    %121 = vector.broadcast %120 : f32 to vector<40x128xf32>
    %122 = arith.mulf %119, %121 : vector<40x128xf32>
    %123 = arith.truncf %122 : vector<40x128xf32> to vector<40x128xbf16>
    %c0_111 = arith.constant 0 : index
    %c0_112 = arith.constant 0 : index
    %c0_113 = arith.constant 0 : index
    %124 = vector.load %arg7[%c0_111, %c0_112, %c0_113] : memref<1x40x128xbf16, #tpu.memory_space<vmem>>, vector<1x40x128xbf16>
    %125 = vector.shape_cast %124 : vector<1x40x128xbf16> to vector<40x128xbf16>
    %126 = vector.shape_cast %123 : vector<40x128xbf16> to vector<1x40x128xbf16>
    tpu.vector_store %arg7[%c0_111, %c0_112, %c0_113], %126 {strides = array<i32>} : memref<1x40x128xbf16, #tpu.memory_space<vmem>>, vector<1x40x128xbf16>,
    return
  }
  func.func @transform_0(%arg0: i32) -> (i32, i32, i32) {
    %c0_i32 = arith.constant 0 : i32
    %c0_i32_0 = arith.constant 0 : i32
    %c0_i32_1 = arith.constant 0 : i32
    return %arg0, %c0_i32, %c0_i32_0 : i32, i32, i32
  }
  func.func @transform_1(%arg0: i32) -> (i32, i32) {
    %c0_i32 = arith.constant 0 : i32
    %c0_i32_0 = arith.constant 0 : i32
    %c0_i32_1 = arith.constant 0 : i32
    return %c0_i32, %c0_i32_0 : i32, i32
  }
  func.func @transform_2(%arg0: i32) -> (i32, i32) {
    %c0_i32 = arith.constant 0 : i32
    %c0_i32_0 = arith.constant 0 : i32
    %c0_i32_1 = arith.constant 0 : i32
    return %c0_i32, %c0_i32_0 : i32, i32
  }
  func.func @transform_3(%arg0: i32) -> (i32, i32, i32) {
    %c0_i32 = arith.constant 0 : i32
    %c0_i32_0 = arith.constant 0 : i32
    %c0_i32_1 = arith.constant 0 : i32
    %c0_i32_2 = arith.constant 0 : i32
    return %c0_i32, %c0_i32_0, %c0_i32_1 : i32, i32, i32
  }
  func.func @transform_4(%arg0: i32) -> (i32, i32) {
    %c0_i32 = arith.constant 0 : i32
    %c0_i32_0 = arith.constant 0 : i32
    %c0_i32_1 = arith.constant 0 : i32
    return %c0_i32, %c0_i32_0 : i32, i32
  }
  func.func @transform_5(%arg0: i32) -> (i32, i32) {
    %c0_i32 = arith.constant 0 : i32
    %c0_i32_0 = arith.constant 0 : i32
    %c0_i32_1 = arith.constant 0 : i32
    return %c0_i32, %c0_i32_0 : i32, i32
  }
  func.func @transform_6(%arg0: i32) -> (i32, i32, i32) {
    %c0_i32 = arith.constant 0 : i32
    %c0_i32_0 = arith.constant 0 : i32
    %c0_i32_1 = arith.constant 0 : i32
    return %arg0, %c0_i32, %c0_i32_0 : i32, i32, i32
  }
}

module attributes {stable_mosaic.version = 11 : i64} {
  func.func @_tail_conv_shortcut_kernel(%arg0: i32, %arg1: memref<32x128xbf16, #tpu.memory_space<vmem>>, %arg2: memref<128x128xbf16, #tpu.memory_space<vmem>>, %arg3: memref<1x128xf32, #tpu.memory_space<vmem>>, %arg4: memref<32x128xbf16, #tpu.memory_space<vmem>>, %arg5: memref<128x128xbf16, #tpu.memory_space<vmem>>, %arg6: memref<1x128xf32, #tpu.memory_space<vmem>>, %arg7: memref<1x3xf32, #tpu.memory_space<smem>>, %arg8: memref<32x128xf32, #tpu.memory_space<vmem>>) attributes {dimension_semantics = [#tpu.dimension_semantics<parallel>], iteration_bounds = array<i64: 1>, scalar_prefetch = 0 : i64, scratch_operands = 0 : i64, tpu.core_type = #tpu.core_type<tc>, window_params = [{transform_indices = @transform_0, window_bounds = array<i64: 32, 128>}, {pipeline_mode = #tpu.pipeline_mode<synchronous>, transform_indices = @transform_1, window_bounds = array<i64: 128, 128>}, {pipeline_mode = #tpu.pipeline_mode<synchronous>, transform_indices = @transform_2, window_bounds = array<i64: 1, 128>}, {transform_indices = @transform_3, window_bounds = array<i64: 32, 128>}, {pipeline_mode = #tpu.pipeline_mode<synchronous>, transform_indices = @transform_4, window_bounds = array<i64: 128, 128>}, {pipeline_mode = #tpu.pipeline_mode<synchronous>, transform_indices = @transform_5, window_bounds = array<i64: 1, 128>}, {transform_indices = @transform_6, window_bounds = array<i64: 1, 3>}, {transform_indices = @transform_7, window_bounds = array<i64: 32, 128>}]} {
    %c0 = arith.constant 0 : index
    %c0_0 = arith.constant 0 : index
    %0 = vector.load %arg1[%c0, %c0_0] : memref<32x128xbf16, #tpu.memory_space<vmem>>, vector<32x128xbf16>
    %c0_1 = arith.constant 0 : index
    %c0_2 = arith.constant 0 : index
    %1 = vector.load %arg2[%c0_1, %c0_2] : memref<128x128xbf16, #tpu.memory_space<vmem>>, vector<128x128xbf16>
    %cst = arith.constant dense<0.000000e+00> : vector<32x128xf32>
    %2 = tpu.matmul %0, %1, %cst {dimension_numbers = #tpu.dot_dimension_numbers<[1], [0], [0], [1], [0, 0, 1, 1], [], []>} : vector<32x128xbf16>, vector<128x128xbf16>, vector<32x128xf32> -> vector<32x128xf32>
    %c0_3 = arith.constant 0 : index
    %c0_4 = arith.constant 0 : index
    %3 = vector.load %arg4[%c0_3, %c0_4] : memref<32x128xbf16, #tpu.memory_space<vmem>>, vector<32x128xbf16>
    %c0_5 = arith.constant 0 : index
    %c0_6 = arith.constant 0 : index
    %4 = vector.load %arg5[%c0_5, %c0_6] : memref<128x128xbf16, #tpu.memory_space<vmem>>, vector<128x128xbf16>
    %cst_7 = arith.constant dense<0.000000e+00> : vector<32x128xf32>
    %5 = tpu.matmul %3, %4, %cst_7 {dimension_numbers = #tpu.dot_dimension_numbers<[1], [0], [0], [1], [0, 0, 1, 1], [], []>} : vector<32x128xbf16>, vector<128x128xbf16>, vector<32x128xf32> -> vector<32x128xf32>
    %6 = arith.addf %2, %5 : vector<32x128xf32>
    %c0_8 = arith.constant 0 : index
    %c0_9 = arith.constant 0 : index
    %7 = vector.load %arg3[%c0_8, %c0_9] : memref<1x128xf32, #tpu.memory_space<vmem>>, vector<1x128xf32>
    %c0_10 = arith.constant 0 : index
    %c0_11 = arith.constant 0 : index
    %8 = vector.load %arg6[%c0_10, %c0_11] : memref<1x128xf32, #tpu.memory_space<vmem>>, vector<1x128xf32>
    %9 = arith.addf %7, %8 : vector<1x128xf32>
    %10 = vector.broadcast %9 : vector<1x128xf32> to vector<32x128xf32>
    %11 = arith.addf %6, %10 : vector<32x128xf32>
    %c0_12 = arith.constant 0 : index
    %c0_13 = arith.constant 0 : index
    %12 = memref.load %arg7[%c0_12, %c0_13] : memref<1x3xf32, #tpu.memory_space<smem>>
    %cst_14 = arith.constant 0.000000e+00 : f32
    %13 = vector.broadcast %cst_14 : f32 to vector<32x128xf32>
    %14 = arith.maximumf %13, %11 : vector<32x128xf32>
    %15 = vector.broadcast %12 : f32 to vector<32x128xf32>
    %16 = arith.minimumf %15, %14 : vector<32x128xf32>
    %c0_15 = arith.constant 0 : index
    %c1 = arith.constant 1 : index
    %17 = memref.load %arg7[%c0_15, %c1] : memref<1x3xf32, #tpu.memory_space<smem>>
    %18 = vector.broadcast %17 : f32 to vector<32x128xf32>
    %19 = arith.mulf %16, %18 : vector<32x128xf32>
    %20 = math.roundeven %19 : vector<32x128xf32>
    %c0_16 = arith.constant 0 : index
    %c2 = arith.constant 2 : index
    %21 = memref.load %arg7[%c0_16, %c2] : memref<1x3xf32, #tpu.memory_space<smem>>
    %22 = vector.broadcast %21 : f32 to vector<32x128xf32>
    %23 = arith.mulf %20, %22 : vector<32x128xf32>
    %c0_17 = arith.constant 0 : index
    %c0_18 = arith.constant 0 : index
    %24 = vector.load %arg8[%c0_17, %c0_18] : memref<32x128xf32, #tpu.memory_space<vmem>>, vector<32x128xf32>
    tpu.vector_store %arg8[%c0_17, %c0_18], %23 {strides = array<i32>} : memref<32x128xf32, #tpu.memory_space<vmem>>, vector<32x128xf32>,
    return
  }
  func.func @transform_0(%arg0: i32) -> (i32, i32) {
    %c0_i32 = arith.constant 0 : i32
    %c0_i32_0 = arith.constant 0 : i32
    return %arg0, %c0_i32 : i32, i32
  }
  func.func @transform_1(%arg0: i32) -> (i32, i32) {
    %c0_i32 = arith.constant 0 : i32
    %c0_i32_0 = arith.constant 0 : i32
    %c0_i32_1 = arith.constant 0 : i32
    return %c0_i32, %c0_i32_0 : i32, i32
  }
  func.func @transform_2(%arg0: i32) -> (i32, i32) {
    %c0_i32 = arith.constant 0 : i32
    %c0_i32_0 = arith.constant 0 : i32
    %c0_i32_1 = arith.constant 0 : i32
    return %c0_i32, %c0_i32_0 : i32, i32
  }
  func.func @transform_3(%arg0: i32) -> (i32, i32) {
    %c0_i32 = arith.constant 0 : i32
    %c0_i32_0 = arith.constant 0 : i32
    return %arg0, %c0_i32 : i32, i32
  }
  func.func @transform_4(%arg0: i32) -> (i32, i32) {
    %c0_i32 = arith.constant 0 : i32
    %c0_i32_0 = arith.constant 0 : i32
    %c0_i32_1 = arith.constant 0 : i32
    return %c0_i32, %c0_i32_0 : i32, i32
  }
  func.func @transform_5(%arg0: i32) -> (i32, i32) {
    %c0_i32 = arith.constant 0 : i32
    %c0_i32_0 = arith.constant 0 : i32
    %c0_i32_1 = arith.constant 0 : i32
    return %c0_i32, %c0_i32_0 : i32, i32
  }
  func.func @transform_6(%arg0: i32) -> (i32, i32) {
    %c0_i32 = arith.constant 0 : i32
    %c0_i32_0 = arith.constant 0 : i32
    %c0_i32_1 = arith.constant 0 : i32
    return %c0_i32, %c0_i32_0 : i32, i32
  }
  func.func @transform_7(%arg0: i32) -> (i32, i32) {
    %c0_i32 = arith.constant 0 : i32
    %c0_i32_0 = arith.constant 0 : i32
    return %arg0, %c0_i32 : i32, i32
  }
}

</mosaic_0001>

<llo_original>
// kernel: bottleneck_forward.3
$region0: #{bottleneck_forward.3}
  #allocation0 [shape = 'u32[]', space=smem, size = 0x4, offset = 0x4, fixed_abs, tag = 'smem constant byte address 0x4 - core index']
  #allocation1 [shape = 'u32[144,128]{1,0:T(1,128)}', space=vmem, size = 0x12000, scoped, tag = 'internal scratch']
  %s0 = inlined_call_operand.vmem [shape: bf16[32,128], index: 0, kind: input, shape index: {}]
  %s1 = inlined_call_operand.vmem [shape: bf16[128,128], index: 1, kind: input, shape index: {}]
  %s2 = inlined_call_operand.vmem [shape: f32[1,128], index: 2, kind: input, shape index: {}]
  %s3 = inlined_call_operand.vmem [shape: bf16[32,128], index: 3, kind: input, shape index: {}]
  %s4 = inlined_call_operand.vmem [shape: bf16[128,128], index: 4, kind: input, shape index: {}]
  %s5 = inlined_call_operand.vmem [shape: f32[1,128], index: 5, kind: input, shape index: {}]
  %s6 = inlined_call_operand.vmem [shape: f32[1,3], index: 6, kind: input, shape index: {}]
  %s7 = inlined_call_operand.hbm [shape: f32[32,128], index: 7, kind: output, shape index: {}]
  %s8 = sld [smem:[#allocation0]]
  $region42: #{bottleneck_forward.3} parent=0
    _
  %s10 = ssub.s32 1, %s8
  %s11 = scalar_select 0, %s10, %s8
  $region1: #{bottleneck_forward.3} parent=0
    #allocation2 [shape = 'u8[512]{0}', space=smem, size = 0x200, scoped, tag = 'input window, operand 6, single buffered']
    #allocation3 [shape = 's32[1]{0}', space=sflag, size = 0x4, scoped, tag = 'scoped memory for bottleneck_forward.3']
    #allocation4 [shape = 's32[1]{0}', space=sflag, size = 0x4, scoped, tag = 'scoped memory for bottleneck_forward.3']
    #allocation5 [shape = 'u8[16384]{0}', space=vmem, size = 0x4000, scoped, tag = 'output window, operand 0, single buffered']
    %12 = vsyncpa [#allocation4], 0
    %13 = vsyncpa [#allocation3], 0
    // Predicated region
    $region2: #{bottleneck_forward.3} parent=1 // pred_check
      _
    $region3: #{bottleneck_forward.3} parent=1 // pred_check_branch
      %15 = sbr.rel (0) target = $region5
    $region4: #{bottleneck_forward.3} parent=1 // pred_region
      _
    $region5: #{bottleneck_forward.3} parent=1 // pred_fallthru
      _
    // Predicated region
    $region6: #{bottleneck_forward.3} parent=1 // pred_check
      _
    $region7: #{bottleneck_forward.3} parent=1 // pred_check_branch
      %17 = sbr.rel (0) target = $region9
    $region8: #{bottleneck_forward.3} parent=1 // pred_region
      _
    $region9: #{bottleneck_forward.3} parent=1 // pred_fallthru
      _
    // Predicated region
    $region10: #{bottleneck_forward.3} parent=1 // pred_check
      _
    $region11: #{bottleneck_forward.3} parent=1 // pred_check_branch
      %19 = sbr.rel (0) target = $region13
    $region12: #{bottleneck_forward.3} parent=1 // pred_region
      _
    $region13: #{bottleneck_forward.3} parent=1 // pred_fallthru
      _
    // Predicated region
    $region14: #{bottleneck_forward.3} parent=1 // pred_check
      _
    $region15: #{bottleneck_forward.3} parent=1 // pred_check_branch
      %21 = sbr.rel (0) target = $region17
    $region16: #{bottleneck_forward.3} parent=1 // pred_region
      _
    $region17: #{bottleneck_forward.3} parent=1 // pred_fallthru
      _
    // Predicated region
    $region18: #{bottleneck_forward.3} parent=1 // pred_check
      _
    $region19: #{bottleneck_forward.3} parent=1 // pred_check_branch
      %23 = sbr.rel (0) target = $region21
    $region20: #{bottleneck_forward.3} parent=1 // pred_region
      _
    $region21: #{bottleneck_forward.3} parent=1 // pred_fallthru
      _
    // Predicated region
    $region22: #{bottleneck_forward.3} parent=1 // pred_check
      _
    $region23: #{bottleneck_forward.3} parent=1 // pred_check_branch
      %25 = sbr.rel (0) target = $region25
    $region24: #{bottleneck_forward.3} parent=1 // pred_region
      _
    $region25: #{bottleneck_forward.3} parent=1 // pred_fallthru
      _
    // Predicated region
    $region26: #{bottleneck_forward.3} parent=1 // pred_check
      _
    $region27: #{bottleneck_forward.3} parent=1 // pred_check_branch
      %27 = sbr.rel (0) target = $region29
    $region28: #{bottleneck_forward.3} parent=1 // pred_region
      %s29 = ssub.s32 16, 16
      %30 = vsyncadd [#allocation4], %s29
      %s32 = sshll.u32 %s6, 4
      %s33 = int_to_ptr.vmem [resolvable:$true] %s32
      %35 = dma.vmem_to_smem %s33, 16, [#allocation2], [#allocation4]
    $region29: #{bottleneck_forward.3} parent=1 // pred_fallthru
      _
    // Predicated region
    $region30: #{bottleneck_forward.3} parent=1 // pred_check
      _
    $region31: #{bottleneck_forward.3} parent=1 // pred_check_branch
      %37 = sbr.rel (0) target = $region33
    $region32: #{bottleneck_forward.3} parent=1 // pred_region
      %38 = dma.done [#allocation4], 16
    $region33: #{bottleneck_forward.3} parent=1 // pred_fallthru
      _
    %39 = sfence
    %v41 = vld [vmem:[%s0] sm:$0xf]
    %v42 = vld [vmem:[%s0 + $0x4] sm:$0xf]
    %v43 = vld [vmem:[%s0 + $0x8] sm:$0xf]
    %v44 = vld [vmem:[%s0 + $0xc] sm:$0xf]
    %v45 = vld [vmem:[%s1] sm:$0xf]
    %v46 = vld [vmem:[%s1 + $0x4] sm:$0xf]
    %v47 = vld [vmem:[%s1 + $0x8] sm:$0xf]
    %v48 = vld [vmem:[%s1 + $0xc] sm:$0xf]
    %v49 = vld [vmem:[%s1 + $0x10] sm:$0xf]
    %v50 = vld [vmem:[%s1 + $0x14] sm:$0xf]
    %v51 = vld [vmem:[%s1 + $0x18] sm:$0xf]
    %v52 = vld [vmem:[%s1 + $0x1c] sm:$0xf]
    %v53 = vld [vmem:[%s1 + $0x20] sm:$0xf]
    %v54 = vld [vmem:[%s1 + $0x24] sm:$0xf]
    %v55 = vld [vmem:[%s1 + $0x28] sm:$0xf]
    %v56 = vld [vmem:[%s1 + $0x2c] sm:$0xf]
    %v57 = vld [vmem:[%s1 + $0x30] sm:$0xf]
    %v58 = vld [vmem:[%s1 + $0x34] sm:$0xf]
    %v59 = vld [vmem:[%s1 + $0x38] sm:$0xf]
    %v60 = vld [vmem:[%s1 + $0x3c] sm:$0xf]
    %v61 = vld [vmem:[%s3] sm:$0xf]
    %v62 = vld [vmem:[%s3 + $0x4] sm:$0xf]
    %v63 = vld [vmem:[%s3 + $0x8] sm:$0xf]
    %v64 = vld [vmem:[%s3 + $0xc] sm:$0xf]
    %v65 = vld [vmem:[%s4] sm:$0xf]
    %v66 = vld [vmem:[%s4 + $0x4] sm:$0xf]
    %v67 = vld [vmem:[%s4 + $0x8] sm:$0xf]
    %v68 = vld [vmem:[%s4 + $0xc] sm:$0xf]
    %v69 = vld [vmem:[%s4 + $0x10] sm:$0xf]
    %v70 = vld [vmem:[%s4 + $0x14] sm:$0xf]
    %v71 = vld [vmem:[%s4 + $0x18] sm:$0xf]
    %v72 = vld [vmem:[%s4 + $0x1c] sm:$0xf]
    %v73 = vld [vmem:[%s4 + $0x20] sm:$0xf]
    %v74 = vld [vmem:[%s4 + $0x24] sm:$0xf]
    %v75 = vld [vmem:[%s4 + $0x28] sm:$0xf]
    %v76 = vld [vmem:[%s4 + $0x2c] sm:$0xf]
    %v77 = vld [vmem:[%s4 + $0x30] sm:$0xf]
    %v78 = vld [vmem:[%s4 + $0x34] sm:$0xf]
    %v79 = vld [vmem:[%s4 + $0x38] sm:$0xf]
    %v80 = vld [vmem:[%s4 + $0x3c] sm:$0xf]
    %v85 = vunpack.c.l.b16 %v61
    %v86 = vunpack.c.l.b16 %v62
    %v87 = vunpack.c.l.b16 %v63
    %v88 = vunpack.c.l.b16 %v64
    %v89 = vpack.c.b16 %v86, %v85
    %v90 = vpack.c.b16 %v88, %v87
    %v109 = vunpack.c.l.b16 %v65
    %v110 = vunpack.c.l.b16 %v66
    %v111 = vunpack.c.l.b16 %v67
    %v112 = vunpack.c.l.b16 %v68
    %v113 = vunpack.c.l.b16 %v69
    %v114 = vunpack.c.l.b16 %v70
    %v115 = vunpack.c.l.b16 %v71
    %v116 = vunpack.c.l.b16 %v72
    %v117 = vunpack.c.l.b16 %v73
    %v118 = vunpack.c.l.b16 %v74
    %v119 = vunpack.c.l.b16 %v75
    %v120 = vunpack.c.l.b16 %v76
    %v121 = vunpack.c.l.b16 %v77
    %v122 = vunpack.c.l.b16 %v78
    %v123 = vunpack.c.l.b16 %v79
    %v124 = vunpack.c.l.b16 %v80
    %v125 = vpack.c.b16 %v110, %v109
    %v126 = vpack.c.b16 %v112, %v111
    %v127 = vpack.c.b16 %v114, %v113
    %v128 = vpack.c.b16 %v116, %v115
    %v129 = vpack.c.b16 %v118, %v117
    %v130 = vpack.c.b16 %v120, %v119
    %v131 = vpack.c.b16 %v122, %v121
    %v132 = vpack.c.b16 %v124, %v123
    %141 = vmatprep.subr.bf16.mxu0 0
    %142 = vmatpush1.bf16.msra.mxu0 %v125
    %143 = vmatprep.subr.bf16.mxu0 0
    %144 = vmatpush1.bf16.msra.mxu0 %v126
    %145 = vmatprep.subr.bf16.mxu0 0
    %146 = vmatpush1.bf16.msra.mxu0 %v127
    %147 = vmatprep.subr.bf16.mxu0 0
    %148 = vmatpush1.bf16.msra.mxu0 %v128
    %149 = vmatprep.subr.bf16.mxu0 0
    %150 = vmatpush1.bf16.msra.mxu0 %v129
    %151 = vmatprep.subr.bf16.mxu0 0
    %152 = vmatpush1.bf16.msra.mxu0 %v130
    %153 = vmatprep.subr.bf16.mxu0 0
    %154 = vmatpush1.bf16.msra.mxu0 %v131
    %155 = vmatprep.subr.bf16.mxu0 0
    %156 = vmatpush1.bf16.msra.mxu0 %v132
    %157 = vmatprep.subr.bf16.mxu0 0
    %158 = vmatpush1.bf16.msra.mxu0 0
    %159 = vmatprep.subr.bf16.mxu0 0
    %160 = vmatpush1.bf16.msra.mxu0 0
    %161 = vmatprep.subr.bf16.mxu0 0
    %162 = vmatpush1.bf16.msra.mxu0 0
    %163 = vmatprep.subr.bf16.mxu0 0
    %164 = vmatpush1.bf16.msra.mxu0 0
    %165 = vmatprep.subr.bf16.mxu0 0
    %166 = vmatpush1.bf16.msra.mxu0 0
    %167 = vmatprep.subr.bf16.mxu0 0
    %168 = vmatpush1.bf16.msra.mxu0 0
    %169 = vmatprep.subr.bf16.mxu0 0
    %170 = vmatpush1.bf16.msra.mxu0 0
    %171 = vmatprep.subr.bf16.mxu0 0
    %172 = vmatpush1.bf16.msra.mxu0 0
    %173 = vmatprep.mubr.bf16.mxu0 0
    %174 = vmatmul.mubr.bf16.gmra.mrb[0].mxu0 %v89
    %v175 = vpop.f32.mrb[0].mxu0
    %v176 = vadd.f32 0.0, %v175
    %v177 = vpop.f32.mrb[0].mxu0
    %v178 = vpop.f32.mrb[0].mxu0
    %v179 = vadd.f32 0.0, %v178
    %v180 = vpop.f32.mrb[0].mxu0
    %181 = vmatprep.mubr.bf16.mxu0 0
    %182 = vmatmul.mubr.bf16.gmra.mrb[0].mxu0 %v90
    %v183 = vpop.f32.mrb[0].mxu0
    %v184 = vadd.f32 0.0, %v183
    %v185 = vpop.f32.mrb[0].mxu0
    %v186 = vpop.f32.mrb[0].mxu0
    %v187 = vadd.f32 0.0, %v186
    %v188 = vpop.f32.mrb[0].mxu0
    %189 = vdwg.mxu0
    %v194 = vunpack.c.l.b16 %v41
    %v195 = vunpack.c.l.b16 %v42
    %v196 = vunpack.c.l.b16 %v43
    %v197 = vunpack.c.l.b16 %v44
    %v198 = vpack.c.b16 %v195, %v194
    %v199 = vpack.c.b16 %v197, %v196
    %v218 = vunpack.c.l.b16 %v45
    %v219 = vunpack.c.l.b16 %v46
    %v220 = vunpack.c.l.b16 %v47
    %v221 = vunpack.c.l.b16 %v48
    %v222 = vunpack.c.l.b16 %v49
    %v223 = vunpack.c.l.b16 %v50
    %v224 = vunpack.c.l.b16 %v51
    %v225 = vunpack.c.l.b16 %v52
    %v226 = vunpack.c.l.b16 %v53
    %v227 = vunpack.c.l.b16 %v54
    %v228 = vunpack.c.l.b16 %v55
    %v229 = vunpack.c.l.b16 %v56
    %v230 = vunpack.c.l.b16 %v57
    %v231 = vunpack.c.l.b16 %v58
    %v232 = vunpack.c.l.b16 %v59
    %v233 = vunpack.c.l.b16 %v60
    %v234 = vpack.c.b16 %v219, %v218
    %v235 = vpack.c.b16 %v221, %v220
    %v236 = vpack.c.b16 %v223, %v222
    %v237 = vpack.c.b16 %v225, %v224
    %v238 = vpack.c.b16 %v227, %v226
    %v239 = vpack.c.b16 %v229, %v228
    %v240 = vpack.c.b16 %v231, %v230
    %v241 = vpack.c.b16 %v233, %v232
    %250 = vmatprep.subr.bf16.mxu0 0
    %251 = vmatpush1.bf16.msra.mxu0 %v234
    %252 = vmatprep.subr.bf16.mxu0 0
    %253 = vmatpush1.bf16.msra.mxu0 %v235
    %254 = vmatprep.subr.bf16.mxu0 0
    %255 = vmatpush1.bf16.msra.mxu0 %v236
    %256 = vmatprep.subr.bf16.mxu0 0
    %257 = vmatpush1.bf16.msra.mxu0 %v237
    %258 = vmatprep.subr.bf16.mxu0 0
    %259 = vmatpush1.bf16.msra.mxu0 %v238
    %260 = vmatprep.subr.bf16.mxu0 0
    %261 = vmatpush1.bf16.msra.mxu0 %v239
    %262 = vmatprep.subr.bf16.mxu0 0
    %263 = vmatpush1.bf16.msra.mxu0 %v240
    %264 = vmatprep.subr.bf16.mxu0 0
    %265 = vmatpush1.bf16.msra.mxu0 %v241
    %266 = vmatprep.subr.bf16.mxu0 0
    %267 = vmatpush1.bf16.msra.mxu0 0
    %268 = vmatprep.subr.bf16.mxu0 0
    %269 = vmatpush1.bf16.msra.mxu0 0
    %270 = vmatprep.subr.bf16.mxu0 0
    %271 = vmatpush1.bf16.msra.mxu0 0
    %272 = vmatprep.subr.bf16.mxu0 0
    %273 = vmatpush1.bf16.msra.mxu0 0
    %274 = vmatprep.subr.bf16.mxu0 0
    %275 = vmatpush1.bf16.msra.mxu0 0
    %276 = vmatprep.subr.bf16.mxu0 0
    %277 = vmatpush1.bf16.msra.mxu0 0
    %278 = vmatprep.subr.bf16.mxu0 0
    %279 = vmatpush1.bf16.msra.mxu0 0
    %280 = vmatprep.subr.bf16.mxu0 0
    %281 = vmatpush1.bf16.msra.mxu0 0
    %282 = vmatprep.mubr.bf16.mxu0 0
    %283 = vmatmul.mubr.bf16.gmra.mrb[0].mxu0 %v198
    %v284 = vpop.f32.mrb[0].mxu0
    %v285 = vadd.f32 %v176, %v284
    %v286 = vpop.f32.mrb[0].mxu0
    %v287 = vpop.f32.mrb[0].mxu0
    %v288 = vadd.f32 %v179, %v287
    %v289 = vpop.f32.mrb[0].mxu0
    %290 = vmatprep.mubr.bf16.mxu0 0
    %291 = vmatmul.mubr.bf16.gmra.mrb[0].mxu0 %v199
    %v292 = vpop.f32.mrb[0].mxu0
    %v293 = vadd.f32 %v184, %v292
    %v294 = vpop.f32.mrb[0].mxu0
    %v295 = vpop.f32.mrb[0].mxu0
    %v296 = vadd.f32 %v187, %v295
    %v297 = vpop.f32.mrb[0].mxu0
    %298 = vdwg.mxu0
    %v299 = vld [vmem:[%s2] sm:$0x1]
    %v300 = vld [vmem:[%s5] sm:$0x1]
    %v301 = vadd.f32 %v299, %v300
    %v303 = vlaneseq
    %v304 = vshrl.u32 %v303, 7
    %v305 = vsub.s32 0, %v304
    %v306 = vrot.slane %v301, %v305
    %v308 = vadd.f32 %v285, %v306
    %v309 = vadd.f32 %v288, %v306
    %v310 = vadd.f32 %v293, %v306
    %v311 = vadd.f32 %v296, %v306
    %s312 = sld [smem:[#allocation2]]
    %v313 = vmax.f32 %v308, 0.0
    %v314 = vmax.f32 %v309, 0.0
    %v315 = vmax.f32 %v310, 0.0
    %v316 = vmax.f32 %v311, 0.0
    %v317 = vstv %s312
    %v318 = vmin.f32 %v317, %v313
    %v319 = vmin.f32 %v317, %v314
    %v320 = vmin.f32 %v317, %v315
    %v321 = vmin.f32 %v317, %v316
    %s322 = sld [smem:[#allocation2 + $0x1]]
    %v323 = vstv %s322
    %v324 = vmul.f32 %v318, %v323
    %v325 = vmul.f32 %v319, %v323
    %v326 = vmul.f32 %v320, %v323
    %v327 = vmul.f32 %v321, %v323
    %v328 = vround.ne.pseudo %v324
    %v329 = vround.ne.pseudo %v325
    %v330 = vround.ne.pseudo %v326
    %v331 = vround.ne.pseudo %v327
    %s332 = sld [smem:[#allocation2 + $0x2]]
    %v333 = vstv %s332
    %v334 = vmul.f32 %v328, %v333
    %v335 = vmul.f32 %v329, %v333
    %v336 = vmul.f32 %v330, %v333
    %v337 = vmul.f32 %v331, %v333
    %338 = vst [vmem:[#allocation5] sm:$0xff] %v334
    %339 = vst [vmem:[#allocation5 + $0x8] sm:$0xff] %v335
    %340 = vst [vmem:[#allocation5 + $0x10] sm:$0xff] %v336
    %341 = vst [vmem:[#allocation5 + $0x18] sm:$0xff] %v337
    // Predicated region
    $region34: #{bottleneck_forward.3} parent=1 // pred_check
      _
    $region35: #{bottleneck_forward.3} parent=1 // pred_check_branch
      %343 = sbr.rel (0) target = $region37
    $region36: #{bottleneck_forward.3} parent=1 // pred_region
      %s345 = ssub.s32 512, 512
      %346 = vsyncadd [#allocation3], %s345
      %s347 = sshll.u32 [#allocation5], 4
      %s348 = int_to_ptr.vmem [resolvable:$true] %s347
      %353 = dma.vmem_to_hbm [thread:$0]  %s348, 512, %s7, [#allocation3], 128, 128, 8
    $region37: #{bottleneck_forward.3} parent=1 // pred_fallthru
      _
    // Predicated region
    $region38: #{bottleneck_forward.3} parent=1 // pred_check
      _
    $region39: #{bottleneck_forward.3} parent=1 // pred_check_branch
      %355 = sbr.rel (0) target = $region41
    $region40: #{bottleneck_forward.3} parent=1 // pred_region
      %356 = dma.done [#allocation3], 512
    $region41: #{bottleneck_forward.3} parent=1 // pred_fallthru
      _
    %357 = vsyncpa [#allocation3], 1
    %358 = vsyncpa [#allocation4], 1

// kernel: bottleneck_forward.2
$region0: #{bottleneck_forward.2}
  #allocation0 [shape = 'u32[]', space=smem, size = 0x4, offset = 0x4, fixed_abs, tag = 'smem constant byte address 0x4 - core index']
  #allocation1 [shape = 'u32[144,128]{1,0:T(1,128)}', space=vmem, size = 0x12000, scoped, tag = 'internal scratch']
  #allocation2 [shape = 'f32[104,128]{1,0:T(8,128)}', space=vmem, size = 0xd000, scoped, tag = 'scratch operand']
  #allocation3 [shape = 'f32[40,128]{1,0:T(8,128)}', space=vmem, size = 0x5000, scoped, tag = 'scratch operand']
  %s0 = inlined_call_operand.vmem [shape: bf16[2,64,128], index: 0, kind: input, shape index: {}]
  %s1 = inlined_call_operand.vmem [shape: bf16[128,128], index: 1, kind: input, shape index: {}]
  %s2 = inlined_call_operand.vmem [shape: f32[1,128], index: 2, kind: input, shape index: {}]
  %s3 = inlined_call_operand.vmem [shape: bf16[9,128,128], index: 3, kind: input, shape index: {}]
  %s4 = inlined_call_operand.vmem [shape: f32[1,128], index: 4, kind: input, shape index: {}]
  %s5 = inlined_call_operand.vmem [shape: f32[2,3], index: 5, kind: input, shape index: {}]
  %s6 = inlined_call_operand.vmem [shape: bf16[2,40,128], index: 6, kind: output, shape index: {}]
  %s7 = sld [smem:[#allocation0]]
  $region61: #{bottleneck_forward.2} parent=0
    _
  %s9 = ssub.s32 1, %s7
  %s10 = scalar_select 0, %s9, %s7
  $region1: #{bottleneck_forward.2} parent=0
    #allocation4 [shape = 'u8[1024]{0}', space=smem, size = 0x400, scoped, tag = 'input window, operand 5, single buffered']
    #allocation5 [shape = 's32[2]{0}', space=sflag, size = 0x8, scoped, tag = 'scoped memory for bottleneck_forward.2']
    %11 = vsyncpa [#allocation5], 0
    loop: start=0, step=1, limit=4
    $region2: #{bottleneck_forward.2} parent=1 // loop_pre_header
      _
    $region3: #{bottleneck_forward.2} parent=1 // loop_header
      %s13 = sphi 0, %s17
      %p14 = scmp.ge.s32.totalorder %s13, 4
      %s23 = sphi 0, %s25
      %s26 = sphi 0, %s23
      %s27 = sphi 0, %s26
      %s43 = sphi 0, %s27
      %s47 = sphi 0, %s47
      %s49 = sphi 0, %s47
      %s50 = sphi 0, %s49
      %s64 = sphi 0, %s50
      %s68 = sphi 0, %s68
      %s70 = sphi 0, %s68
      %s71 = sphi 0, %s70
      %s85 = sphi 0, %s71
      %s89 = sphi 0, %s89
      %s91 = sphi 0, %s89
      %s92 = sphi 0, %s91
      %s106 = sphi 0, %s92
      %s110 = sphi 0, %s110
      %s112 = sphi 0, %s110
      %s113 = sphi 0, %s112
      %s127 = sphi 0, %s113
      %s131 = sphi 0, %s131
      %s133 = sphi 0, %s131
      %s134 = sphi 0, %s133
      %s148 = sphi 0, %s134
      %s154 = sphi 0, %s156
      %s157 = sphi 0, %s154
      %s158 = sphi 0, %s157
      %s174 = sphi 0, %s158
    $region4: #{bottleneck_forward.2} parent=1 // loop_header_branch
      %16 = sbr.rel (%p14) target = $region8
    $region5: #{bottleneck_forward.2} parent=1 // loop_body
      %s18 = ssub.s32 %s13, 1
      %s19 = ssub.s32 %s13, 2
      %s20 = sadd.s32 %s13, 1
      %s21 = ssub.s32 %s13, %s20
      %p22 = scmp.eq.s32.totalorder %s21, 0
      %s24 = sadd.s32 %s23, 1
      %s25 = scalar_select %p22, %s23, %s24
      %p28 = pneg %p22
      %p29 = scmp.eq.s32.totalorder %s13, 1
      %p30 = por %p28, %p29
      %p31 = scmp.ne.s32.totalorder %s23, %s26
      %p32 = scmp.eq.s32.totalorder %s13, 0
      %p33 = por %p31, %p32
      %p34 = scmp.ne.s32.totalorder %s23, %s26
      %p35 = scmp.eq.s32.totalorder %s18, 1
      %p36 = por %p34, %p35
      %p37 = scmp.ne.s32.totalorder %s26, %s27
      %p38 = scmp.eq.s32.totalorder %s18, 0
      %p39 = por %p37, %p38
      %p40 = scmp.ne.s32.totalorder %s26, %s27
      %p41 = scmp.eq.s32.totalorder %s19, 1
      %p42 = por %p40, %p41
      %p44 = scmp.ne.s32.totalorder %s27, %s43
      %p45 = scmp.eq.s32.totalorder %s19, 0
      %p46 = por %p44, %p45
      %s48 = sadd.s32 %s47, 1
      %p51 = scmp.eq.s32.totalorder %s13, 1
      %p52 = scmp.ne.s32.totalorder %s47, %s49
      %p53 = scmp.eq.s32.totalorder %s13, 0
      %p54 = por %p52, %p53
      %p55 = scmp.ne.s32.totalorder %s47, %s49
      %p56 = scmp.eq.s32.totalorder %s18, 1
      %p57 = por %p55, %p56
      %p58 = scmp.ne.s32.totalorder %s49, %s50
      %p59 = scmp.eq.s32.totalorder %s18, 0
      %p60 = por %p58, %p59
      %p61 = scmp.ne.s32.totalorder %s49, %s50
      %p62 = scmp.eq.s32.totalorder %s19, 1
      %p63 = por %p61, %p62
      %p65 = scmp.ne.s32.totalorder %s50, %s64
      %p66 = scmp.eq.s32.totalorder %s19, 0
      %p67 = por %p65, %p66
      %s69 = sadd.s32 %s68, 1
      %p72 = scmp.eq.s32.totalorder %s13, 1
      %p73 = scmp.ne.s32.totalorder %s68, %s70
      %p74 = scmp.eq.s32.totalorder %s13, 0
      %p75 = por %p73, %p74
      %p76 = scmp.ne.s32.totalorder %s68, %s70
      %p77 = scmp.eq.s32.totalorder %s18, 1
      %p78 = por %p76, %p77
      %p79 = scmp.ne.s32.totalorder %s70, %s71
      %p80 = scmp.eq.s32.totalorder %s18, 0
      %p81 = por %p79, %p80
      %p82 = scmp.ne.s32.totalorder %s70, %s71
      %p83 = scmp.eq.s32.totalorder %s19, 1
      %p84 = por %p82, %p83
      %p86 = scmp.ne.s32.totalorder %s71, %s85
      %p87 = scmp.eq.s32.totalorder %s19, 0
      %p88 = por %p86, %p87
      %s90 = sadd.s32 %s89, 1
      %p93 = scmp.eq.s32.totalorder %s13, 1
      %p94 = scmp.ne.s32.totalorder %s89, %s91
      %p95 = scmp.eq.s32.totalorder %s13, 0
      %p96 = por %p94, %p95
      %p97 = scmp.ne.s32.totalorder %s89, %s91
      %p98 = scmp.eq.s32.totalorder %s18, 1
      %p99 = por %p97, %p98
      %p100 = scmp.ne.s32.totalorder %s91, %s92
      %p101 = scmp.eq.s32.totalorder %s18, 0
      %p102 = por %p100, %p101
      %p103 = scmp.ne.s32.totalorder %s91, %s92
      %p104 = scmp.eq.s32.totalorder %s19, 1
      %p105 = por %p103, %p104
      %p107 = scmp.ne.s32.totalorder %s92, %s106
      %p108 = scmp.eq.s32.totalorder %s19, 0
      %p109 = por %p107, %p108
      %s111 = sadd.s32 %s110, 1
      %p114 = scmp.eq.s32.totalorder %s13, 1
      %p115 = scmp.ne.s32.totalorder %s110, %s112
      %p116 = scmp.eq.s32.totalorder %s13, 0
      %p117 = por %p115, %p116
      %p118 = scmp.ne.s32.totalorder %s110, %s112
      %p119 = scmp.eq.s32.totalorder %s18, 1
      %p120 = por %p118, %p119
      %p121 = scmp.ne.s32.totalorder %s112, %s113
      %p122 = scmp.eq.s32.totalorder %s18, 0
      %p123 = por %p121, %p122
      %p124 = scmp.ne.s32.totalorder %s112, %s113
      %p125 = scmp.eq.s32.totalorder %s19, 1
      %p126 = por %p124, %p125
      %p128 = scmp.ne.s32.totalorder %s113, %s127
      %p129 = scmp.eq.s32.totalorder %s19, 0
      %p130 = por %p128, %p129
      %s132 = sadd.s32 %s131, 1
      %p135 = scmp.eq.s32.totalorder %s13, 1
      %p136 = scmp.ne.s32.totalorder %s131, %s133
      %p137 = scmp.eq.s32.totalorder %s13, 0
      %p138 = por %p136, %p137
      %p139 = scmp.ne.s32.totalorder %s131, %s133
      %p140 = scmp.eq.s32.totalorder %s18, 1
      %p141 = por %p139, %p140
      %p142 = scmp.ne.s32.totalorder %s133, %s134
      %p143 = scmp.eq.s32.totalorder %s18, 0
      %p144 = por %p142, %p143
      %p145 = scmp.ne.s32.totalorder %s133, %s134
      %p146 = scmp.eq.s32.totalorder %s19, 1
      %p147 = por %p145, %p146
      %p149 = scmp.ne.s32.totalorder %s134, %s148
      %p150 = scmp.eq.s32.totalorder %s19, 0
      %p151 = por %p149, %p150
      %s152 = ssub.s32 %s13, %s20
      %p153 = scmp.eq.s32.totalorder %s152, 0
      %s155 = sadd.s32 %s154, 1
      %s156 = scalar_select %p153, %s154, %s155
      %p159 = pneg %p153
      %p160 = scmp.eq.s32.totalorder %s13, 1
      %p161 = por %p159, %p160
      %p162 = scmp.ne.s32.totalorder %s154, %s157
      %p163 = scmp.eq.s32.totalorder %s13, 0
      %p164 = por %p162, %p163
      %p165 = scmp.ne.s32.totalorder %s154, %s157
      %p166 = scmp.eq.s32.totalorder %s18, 1
      %p167 = por %p165, %p166
      %p168 = scmp.ne.s32.totalorder %s157, %s158
      %p169 = scmp.eq.s32.totalorder %s18, 0
      %p170 = por %p168, %p169
      %p171 = scmp.ne.s32.totalorder %s157, %s158
      %p172 = scmp.eq.s32.totalorder %s19, 1
      %p173 = por %p171, %p172
      %p175 = scmp.ne.s32.totalorder %s158, %s174
      %p176 = scmp.eq.s32.totalorder %s19, 0
      %p177 = por %p175, %p176
      %p178 = scmp.le.s32.totalorder 1, %s13
      %p179 = scmp.lt.s32.totalorder %s13, 3
      %p180 = pnand %p178, %p179
      %p181 = pneg %p180
      // Predicated region
      $region9: #{bottleneck_forward.2} parent=5 // pred_check
        _
      $region10: #{bottleneck_forward.2} parent=5 // pred_check_branch
        %183 = sbr.rel (%p180) target = $region12
      $region11: #{bottleneck_forward.2} parent=5 // pred_region
        %s184 = ssub.s32 %s13, 1
        // Predicated region
        $region13: #{bottleneck_forward.2} parent=11 // pred_check
          %p185 = pneg %p60
        $region14: #{bottleneck_forward.2} parent=11 // pred_check_branch
          %187 = sbr.rel (%p185) target = $region16
        $region15: #{bottleneck_forward.2} parent=11 // pred_region
          _
        $region16: #{bottleneck_forward.2} parent=11 // pred_fallthru
          _
        // Predicated region
        $region17: #{bottleneck_forward.2} parent=11 // pred_check
          %p188 = pneg %p81
        $region18: #{bottleneck_forward.2} parent=11 // pred_check_branch
          %190 = sbr.rel (%p188) target = $region20
        $region19: #{bottleneck_forward.2} parent=11 // pred_region
          _
        $region20: #{bottleneck_forward.2} parent=11 // pred_fallthru
          _
        // Predicated region
        $region21: #{bottleneck_forward.2} parent=11 // pred_check
          %p191 = pneg %p102
        $region22: #{bottleneck_forward.2} parent=11 // pred_check_branch
          %193 = sbr.rel (%p191) target = $region24
        $region23: #{bottleneck_forward.2} parent=11 // pred_region
          _
        $region24: #{bottleneck_forward.2} parent=11 // pred_fallthru
          _
        // Predicated region
        $region25: #{bottleneck_forward.2} parent=11 // pred_check
          %p194 = pneg %p123
        $region26: #{bottleneck_forward.2} parent=11 // pred_check_branch
          %196 = sbr.rel (%p194) target = $region28
        $region27: #{bottleneck_forward.2} parent=11 // pred_region
          _
        $region28: #{bottleneck_forward.2} parent=11 // pred_fallthru
          _
        // Predicated region
        $region29: #{bottleneck_forward.2} parent=11 // pred_check
          %p197 = pneg %p144
        $region30: #{bottleneck_forward.2} parent=11 // pred_check_branch
          %199 = sbr.rel (%p197) target = $region32
        $region31: #{bottleneck_forward.2} parent=11 // pred_region
          %s201 = ssub.s32 32, 32
          %202 = vsyncadd [#allocation5], %s201
          %s204 = sshll.u32 %s5, 4
          %s205 = int_to_ptr.vmem [resolvable:$true] %s204
          %207 = dma.vmem_to_smem %s205, 32, [#allocation4], [#allocation5]
        $region32: #{bottleneck_forward.2} parent=11 // pred_fallthru
          _
      $region12: #{bottleneck_forward.2} parent=5 // pred_fallthru
        _
      %p208 = scmp.lt.s32.totalorder %s13, 2
      // Predicated region
      $region33: #{bottleneck_forward.2} parent=5 // pred_check
        %p209 = pneg %p208
      $region34: #{bottleneck_forward.2} parent=5 // pred_check_branch
        %211 = sbr.rel (%p209) target = $region36
      $region35: #{bottleneck_forward.2} parent=5 // pred_region
        // Predicated region
        $region37: #{bottleneck_forward.2} parent=35 // pred_check
          %p212 = pneg %p33
        $region38: #{bottleneck_forward.2} parent=35 // pred_check_branch
          %214 = sbr.rel (%p212) target = $region40
        $region39: #{bottleneck_forward.2} parent=35 // pred_region
          %p215 = scmp.lt.s32.totalorder %s13, 1
          %s216 = scalar_select %p215, %s13, 1
          %s217 = smul.addr %s216, 8
          %s218 = smul.addr %s217, 4
          %s219 = scalar_lea.vmem %s0, %s218
        $region40: #{bottleneck_forward.2} parent=35 // pred_fallthru
          _
      $region36: #{bottleneck_forward.2} parent=5 // pred_fallthru
        _
      %p220 = scmp.le.s32.totalorder 1, %s13
      %p221 = scmp.lt.s32.totalorder %s13, 3
      %p222 = pnand %p220, %p221
      %p223 = pneg %p222
      // Predicated region
      $region41: #{bottleneck_forward.2} parent=5 // pred_check
        _
      $region42: #{bottleneck_forward.2} parent=5 // pred_check_branch
        %225 = sbr.rel (%p222) target = $region44
      $region43: #{bottleneck_forward.2} parent=5 // pred_region
        %s226 = ssub.s32 %s13, 1
        // Predicated region
        $region45: #{bottleneck_forward.2} parent=43 // pred_check
          %p227 = pneg %p144
        $region46: #{bottleneck_forward.2} parent=43 // pred_check_branch
          %229 = sbr.rel (%p227) target = $region48
        $region47: #{bottleneck_forward.2} parent=43 // pred_region
          %230 = dma.done [#allocation5], 32
        $region48: #{bottleneck_forward.2} parent=43 // pred_fallthru
          _
        %231 = sfence
        %p232 = scmp.lt.s32.totalorder %s18, 1
        %s233 = scalar_select %p232, %s18, 1
        %s234 = smul.addr %s233, 8
        %s235 = smul.addr %s234, 4
        %s236 = scalar_lea.vmem %s0, %s235
        %p237 = pneg %p39
        %p238 = pneg %p36
        %p239 = pneg %p60
        %p240 = pneg %p57
        %p241 = pneg %p81
        %p242 = pneg %p78
        %p243 = pneg %p102
        %p244 = pneg %p99
        %p245 = pneg %p123
        %p246 = pneg %p120
        %p247 = pneg %p144
        %p248 = pneg %p141
        %p249 = pneg %p170
        %p250 = pneg %p167
        %p251 = scmp.lt.s32.totalorder %s18, 1
        %s252 = scalar_select %p251, %s18, 1
        %s253 = smul.addr %s252, 5
        %s254 = smul.addr %s253, 4
        %s255 = scalar_lea.vmem %s6, %s254
        %p256 = scmp.lt.s32.totalorder %s18, 1
        %s257 = scalar_select %p256, %s18, 1
        %s258 = smul.addr %s257, 8
        %s259 = smul.addr %s258, 4
        %s260 = scalar_lea.vmem %s0, %s259
        %p261 = scmp.lt.s32.totalorder %s18, 1
        %s262 = scalar_select %p261, %s18, 1
        %s263 = smul.addr %s262, 5
        %s264 = smul.addr %s263, 4
        %s265 = scalar_lea.vmem %s6, %s264
        %267 = vst [vmem:[#allocation2] sm:$0xff] 0.0
        %268 = vst [vmem:[#allocation2 + $0x8] sm:$0xff] 0.0
        %269 = vst [vmem:[#allocation2 + $0x10] sm:$0xff] 0.0
        %270 = vst [vmem:[#allocation2 + $0x18] sm:$0xff] 0.0
        %271 = vst [vmem:[#allocation2 + $0x20] sm:$0xff] 0.0
        %272 = vst [vmem:[#allocation2 + $0x28] sm:$0xff] 0.0
        %273 = vst [vmem:[#allocation2 + $0x30] sm:$0xff] 0.0
        %274 = vst [vmem:[#allocation2 + $0x38] sm:$0xff] 0.0
        %275 = vst [vmem:[#allocation2 + $0x40] sm:$0xff] 0.0
        %276 = vst [vmem:[#allocation2 + $0x48] sm:$0xff] 0.0
        %277 = vst [vmem:[#allocation2 + $0x50] sm:$0xff] 0.0
        %278 = vst [vmem:[#allocation2 + $0x58] sm:$0xff] 0.0
        %279 = vst [vmem:[#allocation2 + $0x60] sm:$0xff] 0.0
        %v280 = vld [vmem:[%s260] sm:$0xf]
        %v281 = vld [vmem:[%s260 + $0x4] sm:$0xf]
        %v282 = vld [vmem:[%s260 + $0x8] sm:$0xf]
        %v283 = vld [vmem:[%s260 + $0xc] sm:$0xf]
        %v284 = vld [vmem:[%s260 + $0x10] sm:$0xf]
        %v285 = vld [vmem:[%s260 + $0x14] sm:$0xf]
        %v286 = vld [vmem:[%s260 + $0x18] sm:$0xf]
        %v287 = vld [vmem:[%s260 + $0x1c] sm:$0xf]
        %v288 = vld [vmem:[%s1] sm:$0xf]
        %v289 = vld [vmem:[%s1 + $0x4] sm:$0xf]
        %v290 = vld [vmem:[%s1 + $0x8] sm:$0xf]
        %v291 = vld [vmem:[%s1 + $0xc] sm:$0xf]
        %v292 = vld [vmem:[%s1 + $0x10] sm:$0xf]
        %v293 = vld [vmem:[%s1 + $0x14] sm:$0xf]
        %v294 = vld [vmem:[%s1 + $0x18] sm:$0xf]
        %v295 = vld [vmem:[%s1 + $0x1c] sm:$0xf]
        %v296 = vld [vmem:[%s1 + $0x20] sm:$0xf]
        %v297 = vld [vmem:[%s1 + $0x24] sm:$0xf]
        %v298 = vld [vmem:[%s1 + $0x28] sm:$0xf]
        %v299 = vld [vmem:[%s1 + $0x2c] sm:$0xf]
        %v300 = vld [vmem:[%s1 + $0x30] sm:$0xf]
        %v301 = vld [vmem:[%s1 + $0x34] sm:$0xf]
        %v302 = vld [vmem:[%s1 + $0x38] sm:$0xf]
        %v303 = vld [vmem:[%s1 + $0x3c] sm:$0xf]
        %v304 = vld [vmem:[%s2] sm:$0x1]
        %v306 = vlaneseq
        %v307 = vshrl.u32 %v306, 7
        %v308 = vsub.s32 0, %v307
        %v309 = vrot.slane %v304, %v308
        %v319 = vunpack.c.l.b16 %v280
        %v320 = vunpack.c.l.b16 %v281
        %v321 = vunpack.c.l.b16 %v282
        %v322 = vunpack.c.l.b16 %v283
        %v323 = vunpack.c.l.b16 %v284
        %v324 = vunpack.c.l.b16 %v285
        %v325 = vunpack.c.l.b16 %v286
        %v326 = vunpack.c.l.b16 %v287
        %v327 = vpack.c.b16 %v320, %v319
        %v328 = vpack.c.b16 %v322, %v321
        %v329 = vpack.c.b16 %v324, %v323
        %v330 = vpack.c.b16 %v326, %v325
        %v351 = vunpack.c.l.b16 %v288
        %v352 = vunpack.c.l.b16 %v289
        %v353 = vunpack.c.l.b16 %v290
        %v354 = vunpack.c.l.b16 %v291
        %v355 = vunpack.c.l.b16 %v292
        %v356 = vunpack.c.l.b16 %v293
        %v357 = vunpack.c.l.b16 %v294
        %v358 = vunpack.c.l.b16 %v295
        %v359 = vunpack.c.l.b16 %v296
        %v360 = vunpack.c.l.b16 %v297
        %v361 = vunpack.c.l.b16 %v298
        %v362 = vunpack.c.l.b16 %v299
        %v363 = vunpack.c.l.b16 %v300
        %v364 = vunpack.c.l.b16 %v301
        %v365 = vunpack.c.l.b16 %v302
        %v366 = vunpack.c.l.b16 %v303
        %v367 = vpack.c.b16 %v352, %v351
        %v368 = vpack.c.b16 %v354, %v353
        %v369 = vpack.c.b16 %v356, %v355
        %v370 = vpack.c.b16 %v358, %v357
        %v371 = vpack.c.b16 %v360, %v359
        %v372 = vpack.c.b16 %v362, %v361
        %v373 = vpack.c.b16 %v364, %v363
        %v374 = vpack.c.b16 %v366, %v365
        %383 = vmatprep.subr.bf16.mxu0 0
        %384 = vmatpush1.bf16.msra.mxu0 %v367
        %385 = vmatprep.subr.bf16.mxu0 0
        %386 = vmatpush1.bf16.msra.mxu0 %v368
        %387 = vmatprep.subr.bf16.mxu0 0
        %388 = vmatpush1.bf16.msra.mxu0 %v369
        %389 = vmatprep.subr.bf16.mxu0 0
        %390 = vmatpush1.bf16.msra.mxu0 %v370
        %391 = vmatprep.subr.bf16.mxu0 0
        %392 = vmatpush1.bf16.msra.mxu0 %v371
        %393 = vmatprep.subr.bf16.mxu0 0
        %394 = vmatpush1.bf16.msra.mxu0 %v372
        %395 = vmatprep.subr.bf16.mxu0 0
        %396 = vmatpush1.bf16.msra.mxu0 %v373
        %397 = vmatprep.subr.bf16.mxu0 0
        %398 = vmatpush1.bf16.msra.mxu0 %v374
        %399 = vmatprep.subr.bf16.mxu0 0
        %400 = vmatpush1.bf16.msra.mxu0 0
        %401 = vmatprep.subr.bf16.mxu0 0
        %402 = vmatpush1.bf16.msra.mxu0 0
        %403 = vmatprep.subr.bf16.mxu0 0
        %404 = vmatpush1.bf16.msra.mxu0 0
        %405 = vmatprep.subr.bf16.mxu0 0
        %406 = vmatpush1.bf16.msra.mxu0 0
        %407 = vmatprep.subr.bf16.mxu0 0
        %408 = vmatpush1.bf16.msra.mxu0 0
        %409 = vmatprep.subr.bf16.mxu0 0
        %410 = vmatpush1.bf16.msra.mxu0 0
        %411 = vmatprep.subr.bf16.mxu0 0
        %412 = vmatpush1.bf16.msra.mxu0 0
        %413 = vmatprep.subr.bf16.mxu0 0
        %414 = vmatpush1.bf16.msra.mxu0 0
        %415 = vmatprep.mubr.bf16.mxu0 0
        %416 = vmatmul.mubr.bf16.gmra.mrb[0].mxu0 %v327
        %v417 = vpop.f32.mrb[0].mxu0
        %v418 = vadd.f32 %v309, %v417
        %v419 = vpop.f32.mrb[0].mxu0
        %v420 = vpop.f32.mrb[0].mxu0
        %v421 = vadd.f32 %v309, %v420
        %v422 = vpop.f32.mrb[0].mxu0
        %423 = vmatprep.mubr.bf16.mxu0 0
        %424 = vmatmul.mubr.bf16.gmra.mrb[0].mxu0 %v328
        %v425 = vpop.f32.mrb[0].mxu0
        %v426 = vadd.f32 %v309, %v425
        %v427 = vpop.f32.mrb[0].mxu0
        %v428 = vpop.f32.mrb[0].mxu0
        %v429 = vadd.f32 %v309, %v428
        %v430 = vpop.f32.mrb[0].mxu0
        %431 = vmatprep.mubr.bf16.mxu0 0
        %432 = vmatmul.mubr.bf16.gmra.mrb[0].mxu0 %v329
        %v433 = vpop.f32.mrb[0].mxu0
        %v434 = vadd.f32 %v309, %v433
        %v435 = vpop.f32.mrb[0].mxu0
        %v436 = vpop.f32.mrb[0].mxu0
        %v437 = vadd.f32 %v309, %v436
        %v438 = vpop.f32.mrb[0].mxu0
        %439 = vmatprep.mubr.bf16.mxu0 0
        %440 = vmatmul.mubr.bf16.gmra.mrb[0].mxu0 %v330
        %v441 = vpop.f32.mrb[0].mxu0
        %v442 = vadd.f32 %v309, %v441
        %v443 = vpop.f32.mrb[0].mxu0
        %v444 = vpop.f32.mrb[0].mxu0
        %v445 = vadd.f32 %v309, %v444
        %v446 = vpop.f32.mrb[0].mxu0
        %447 = vdwg.mxu0
        %s448 = sld [smem:[#allocation4]]
        %v449 = vmax.f32 %v418, 0.0
        %v450 = vmax.f32 %v421, 0.0
        %v451 = vmax.f32 %v426, 0.0
        %v452 = vmax.f32 %v429, 0.0
        %v453 = vmax.f32 %v434, 0.0
        %v454 = vmax.f32 %v437, 0.0
        %v455 = vmax.f32 %v442, 0.0
        %v456 = vmax.f32 %v445, 0.0
        %v457 = vstv %s448
        %v458 = vmin.f32 %v457, %v449
        %v459 = vmin.f32 %v457, %v450
        %v460 = vmin.f32 %v457, %v451
        %v461 = vmin.f32 %v457, %v452
        %v462 = vmin.f32 %v457, %v453
        %v463 = vmin.f32 %v457, %v454
        %v464 = vmin.f32 %v457, %v455
        %v465 = vmin.f32 %v457, %v456
        %s466 = sld [smem:[#allocation4 + $0x1]]
        %v467 = vstv %s466
        %v468 = vmul.f32 %v458, %v467
        %v469 = vmul.f32 %v459, %v467
        %v470 = vmul.f32 %v460, %v467
        %v471 = vmul.f32 %v461, %v467
        %v472 = vmul.f32 %v462, %v467
        %v473 = vmul.f32 %v463, %v467
        %v474 = vmul.f32 %v464, %v467
        %v475 = vmul.f32 %v465, %v467
        %v476 = vround.ne.pseudo %v468
        %v477 = vround.ne.pseudo %v469
        %v478 = vround.ne.pseudo %v470
        %v479 = vround.ne.pseudo %v471
        %v480 = vround.ne.pseudo %v472
        %v481 = vround.ne.pseudo %v473
        %v482 = vround.ne.pseudo %v474
        %v483 = vround.ne.pseudo %v475
        %s484 = sld [smem:[#allocation4 + $0x2]]
        %v485 = vstv %s484
        %v486 = vmul.f32 %v476, %v485
        %v487 = vmul.f32 %v477, %v485
        %v488 = vmul.f32 %v478, %v485
        %v489 = vmul.f32 %v479, %v485
        %v490 = vmul.f32 %v480, %v485
        %v491 = vmul.f32 %v481, %v485
        %v492 = vmul.f32 %v482, %v485
        %v493 = vmul.f32 %v483, %v485
        %494 = vst [vmem:[#allocation2 + $0xb] sm:$0xff] %v486
        %495 = vst [vmem:[#allocation2 + $0x15] sm:$0xff] %v487
        %496 = vst [vmem:[#allocation2 + $0x1f] sm:$0xff] %v488
        %497 = vst [vmem:[#allocation2 + $0x29] sm:$0xff] %v489
        %498 = vst [vmem:[#allocation2 + $0x33] sm:$0xff] %v490
        %499 = vst [vmem:[#allocation2 + $0x3d] sm:$0xff] %v491
        %500 = vst [vmem:[#allocation2 + $0x47] sm:$0xff] %v492
        %501 = vst [vmem:[#allocation2 + $0x51] sm:$0xff] %v493
        %v502 = vld [vmem:[#allocation2] ss:$2 sm:$0xff]
        %s503 = scalar_lea.vmem [#allocation2], 16
        %v504 = vld [vmem:[%s503] ss:$2 sm:$0xff]
        %s505 = scalar_lea.vmem [#allocation2], 32
        %v506 = vld [vmem:[%s505] ss:$2 sm:$0xff]
        %s507 = scalar_lea.vmem [#allocation2], 48
        %v508 = vld [vmem:[%s507] ss:$2 sm:$0xff]
        %s509 = scalar_lea.vmem [#allocation2], 64
        %v510 = vld [vmem:[%s509] ss:$2 sm:$0xff]
        %v511 = vpack.c.bf16 %v504, %v502
        %v512 = vpack.c.bf16 %v508, %v506
        %v513 = vpack.c.bf16 %v510, %v510
        %v514 = vld [vmem:[%s3] sm:$0xf]
        %v515 = vld [vmem:[%s3 + $0x4] sm:$0xf]
        %v516 = vld [vmem:[%s3 + $0x8] sm:$0xf]
        %v517 = vld [vmem:[%s3 + $0xc] sm:$0xf]
        %v518 = vld [vmem:[%s3 + $0x10] sm:$0xf]
        %v519 = vld [vmem:[%s3 + $0x14] sm:$0xf]
        %v520 = vld [vmem:[%s3 + $0x18] sm:$0xf]
        %v521 = vld [vmem:[%s3 + $0x1c] sm:$0xf]
        %v522 = vld [vmem:[%s3 + $0x20] sm:$0xf]
        %v523 = vld [vmem:[%s3 + $0x24] sm:$0xf]
        %v524 = vld [vmem:[%s3 + $0x28] sm:$0xf]
        %v525 = vld [vmem:[%s3 + $0x2c] sm:$0xf]
        %v526 = vld [vmem:[%s3 + $0x30] sm:$0xf]
        %v527 = vld [vmem:[%s3 + $0x34] sm:$0xf]
        %v528 = vld [vmem:[%s3 + $0x38] sm:$0xf]
        %v529 = vld [vmem:[%s3 + $0x3c] sm:$0xf]
        %v546 = vunpack.c.l.b16 %v514
        %v547 = vunpack.c.l.b16 %v515
        %v548 = vunpack.c.l.b16 %v516
        %v549 = vunpack.c.l.b16 %v517
        %v550 = vunpack.c.l.b16 %v518
        %v551 = vunpack.c.l.b16 %v519
        %v552 = vunpack.c.l.b16 %v520
        %v553 = vunpack.c.l.b16 %v521
        %v554 = vunpack.c.l.b16 %v522
        %v555 = vunpack.c.l.b16 %v523
        %v556 = vunpack.c.l.b16 %v524
        %v557 = vunpack.c.l.b16 %v525
        %v558 = vunpack.c.l.b16 %v526
        %v559 = vunpack.c.l.b16 %v527
        %v560 = vunpack.c.l.b16 %v528
        %v561 = vunpack.c.l.b16 %v529
        %v562 = vpack.c.b16 %v547, %v546
        %v563 = vpack.c.b16 %v549, %v548
        %v564 = vpack.c.b16 %v551, %v550
        %v565 = vpack.c.b16 %v553, %v552
        %v566 = vpack.c.b16 %v555, %v554
        %v567 = vpack.c.b16 %v557, %v556
        %v568 = vpack.c.b16 %v559, %v558
        %v569 = vpack.c.b16 %v561, %v560
        %578 = vmatprep.subr.bf16.mxu0 0
        %579 = vmatpush1.bf16.msra.mxu0 %v562
        %580 = vmatprep.subr.bf16.mxu0 0
        %581 = vmatpush1.bf16.msra.mxu0 %v563
        %582 = vmatprep.subr.bf16.mxu0 0
        %583 = vmatpush1.bf16.msra.mxu0 %v564
        %584 = vmatprep.subr.bf16.mxu0 0
        %585 = vmatpush1.bf16.msra.mxu0 %v565
        %586 = vmatprep.subr.bf16.mxu0 0
        %587 = vmatpush1.bf16.msra.mxu0 %v566
        %588 = vmatprep.subr.bf16.mxu0 0
        %589 = vmatpush1.bf16.msra.mxu0 %v567
        %590 = vmatprep.subr.bf16.mxu0 0
        %591 = vmatpush1.bf16.msra.mxu0 %v568
        %592 = vmatprep.subr.bf16.mxu0 0
        %593 = vmatpush1.bf16.msra.mxu0 %v569
        %594 = vmatprep.subr.bf16.mxu0 0
        %595 = vmatpush1.bf16.msra.mxu0 0
        %596 = vmatprep.subr.bf16.mxu0 0
        %597 = vmatpush1.bf16.msra.mxu0 0
        %598 = vmatprep.subr.bf16.mxu0 0
        %599 = vmatpush1.bf16.msra.mxu0 0
        %600 = vmatprep.subr.bf16.mxu0 0
        %601 = vmatpush1.bf16.msra.mxu0 0
        %602 = vmatprep.subr.bf16.mxu0 0
        %603 = vmatpush1.bf16.msra.mxu0 0
        %604 = vmatprep.subr.bf16.mxu0 0
        %605 = vmatpush1.bf16.msra.mxu0 0
        %606 = vmatprep.subr.bf16.mxu0 0
        %607 = vmatpush1.bf16.msra.mxu0 0
        %608 = vmatprep.subr.bf16.mxu0 0
        %609 = vmatpush1.bf16.msra.mxu0 0
        %610 = vmatprep.mubr.bf16.mxu0 0
        %611 = vmatmul.mubr.bf16.gmra.mrb[0].mxu0 %v511
        %v612 = vpop.f32.mrb[0].mxu0
        %v613 = vadd.f32 0.0, %v612
        %v614 = vpop.f32.mrb[0].mxu0
        %v615 = vpop.f32.mrb[0].mxu0
        %v616 = vadd.f32 0.0, %v615
        %v617 = vpop.f32.mrb[0].mxu0
        %618 = vmatprep.mubr.bf16.mxu0 0
        %619 = vmatmul.mubr.bf16.gmra.mrb[0].mxu0 %v512
        %v620 = vpop.f32.mrb[0].mxu0
        %v621 = vadd.f32 0.0, %v620
        %v622 = vpop.f32.mrb[0].mxu0
        %v623 = vpop.f32.mrb[0].mxu0
        %v624 = vadd.f32 0.0, %v623
        %v625 = vpop.f32.mrb[0].mxu0
        %626 = vmatprep.mubr.bf16.mxu0 0
        %627 = vmatmul.mubr.bf16.gmra.mrb[0].mxu0 %v513
        %v628 = vpop.f32.mrb[0].mxu0
        %v629 = vadd.f32 0.0, %v628
        %v630 = vpop.f32.mrb[0].mxu0
        %v631 = vpop.f32.mrb[0].mxu0
        %v632 = vpop.f32.mrb[0].mxu0
        %633 = vdwg.mxu0
        %634 = vst [vmem:[#allocation3] sm:$0xff] %v613
        %635 = vst [vmem:[#allocation3 + $0x8] sm:$0xff] %v616
        %636 = vst [vmem:[#allocation3 + $0x10] sm:$0xff] %v621
        %637 = vst [vmem:[#allocation3 + $0x18] sm:$0xff] %v624
        %638 = vst [vmem:[#allocation3 + $0x20] sm:$0xff] %v629
        %s639 = scalar_lea.vmem [#allocation2], 1
        %v640 = vld [vmem:[%s639] ss:$2 sm:$0xff]
        %s641 = scalar_lea.vmem [#allocation2], 17
        %v642 = vld [vmem:[%s641] ss:$2 sm:$0xff]
        %s643 = scalar_lea.vmem [#allocation2], 33
        %v644 = vld [vmem:[%s643] ss:$2 sm:$0xff]
        %s645 = scalar_lea.vmem [#allocation2], 49
        %v646 = vld [vmem:[%s645] ss:$2 sm:$0xff]
        %s647 = scalar_lea.vmem [#allocation2], 65
        %v648 = vld [vmem:[%s647] ss:$2 sm:$0xff]
        %v649 = vpack.c.bf16 %v642, %v640
        %v650 = vpack.c.bf16 %v646, %v644
        %v651 = vpack.c.bf16 %v648, %v648
        %s652 = scalar_lea.vmem %s3, 64
        %v653 = vld [vmem:[%s652] sm:$0xf]
        %v654 = vld [vmem:[%s652 + $0x4] sm:$0xf]
        %v655 = vld [vmem:[%s652 + $0x8] sm:$0xf]
        %v656 = vld [vmem:[%s652 + $0xc] sm:$0xf]
        %v657 = vld [vmem:[%s652 + $0x10] sm:$0xf]
        %v658 = vld [vmem:[%s652 + $0x14] sm:$0xf]
        %v659 = vld [vmem:[%s652 + $0x18] sm:$0xf]
        %v660 = vld [vmem:[%s652 + $0x1c] sm:$0xf]
        %v661 = vld [vmem:[%s652 + $0x20] sm:$0xf]
        %v662 = vld [vmem:[%s652 + $0x24] sm:$0xf]
        %v663 = vld [vmem:[%s652 + $0x28] sm:$0xf]
        %v664 = vld [vmem:[%s652 + $0x2c] sm:$0xf]
        %v665 = vld [vmem:[%s652 + $0x30] sm:$0xf]
        %v666 = vld [vmem:[%s652 + $0x34] sm:$0xf]
        %v667 = vld [vmem:[%s652 + $0x38] sm:$0xf]
        %v668 = vld [vmem:[%s652 + $0x3c] sm:$0xf]
        %v685 = vunpack.c.l.b16 %v653
        %v686 = vunpack.c.l.b16 %v654
        %v687 = vunpack.c.l.b16 %v655
        %v688 = vunpack.c.l.b16 %v656
        %v689 = vunpack.c.l.b16 %v657
        %v690 = vunpack.c.l.b16 %v658
        %v691 = vunpack.c.l.b16 %v659
        %v692 = vunpack.c.l.b16 %v660
        %v693 = vunpack.c.l.b16 %v661
        %v694 = vunpack.c.l.b16 %v662
        %v695 = vunpack.c.l.b16 %v663
        %v696 = vunpack.c.l.b16 %v664
        %v697 = vunpack.c.l.b16 %v665
        %v698 = vunpack.c.l.b16 %v666
        %v699 = vunpack.c.l.b16 %v667
        %v700 = vunpack.c.l.b16 %v668
        %v701 = vpack.c.b16 %v686, %v685
        %v702 = vpack.c.b16 %v688, %v687
        %v703 = vpack.c.b16 %v690, %v689
        %v704 = vpack.c.b16 %v692, %v691
        %v705 = vpack.c.b16 %v694, %v693
        %v706 = vpack.c.b16 %v696, %v695
        %v707 = vpack.c.b16 %v698, %v697
        %v708 = vpack.c.b16 %v700, %v699
        %717 = vmatprep.subr.bf16.mxu0 0
        %718 = vmatpush1.bf16.msra.mxu0 %v701
        %719 = vmatprep.subr.bf16.mxu0 0
        %720 = vmatpush1.bf16.msra.mxu0 %v702
        %721 = vmatprep.subr.bf16.mxu0 0
        %722 = vmatpush1.bf16.msra.mxu0 %v703
        %723 = vmatprep.subr.bf16.mxu0 0
        %724 = vmatpush1.bf16.msra.mxu0 %v704
        %725 = vmatprep.subr.bf16.mxu0 0
        %726 = vmatpush1.bf16.msra.mxu0 %v705
        %727 = vmatprep.subr.bf16.mxu0 0
        %728 = vmatpush1.bf16.msra.mxu0 %v706
        %729 = vmatprep.subr.bf16.mxu0 0
        %730 = vmatpush1.bf16.msra.mxu0 %v707
        %731 = vmatprep.subr.bf16.mxu0 0
        %732 = vmatpush1.bf16.msra.mxu0 %v708
        %733 = vmatprep.subr.bf16.mxu0 0
        %734 = vmatpush1.bf16.msra.mxu0 0
        %735 = vmatprep.subr.bf16.mxu0 0
        %736 = vmatpush1.bf16.msra.mxu0 0
        %737 = vmatprep.subr.bf16.mxu0 0
        %738 = vmatpush1.bf16.msra.mxu0 0
        %739 = vmatprep.subr.bf16.mxu0 0
        %740 = vmatpush1.bf16.msra.mxu0 0
        %741 = vmatprep.subr.bf16.mxu0 0
        %742 = vmatpush1.bf16.msra.mxu0 0
        %743 = vmatprep.subr.bf16.mxu0 0
        %744 = vmatpush1.bf16.msra.mxu0 0
        %745 = vmatprep.subr.bf16.mxu0 0
        %746 = vmatpush1.bf16.msra.mxu0 0
        %747 = vmatprep.subr.bf16.mxu0 0
        %748 = vmatpush1.bf16.msra.mxu0 0
        %749 = vmatprep.mubr.bf16.mxu0 0
        %750 = vmatmul.mubr.bf16.gmra.mrb[0].mxu0 %v649
        %v751 = vpop.f32.mrb[0].mxu0
        %v752 = vadd.f32 0.0, %v751
        %v753 = vpop.f32.mrb[0].mxu0
        %v754 = vpop.f32.mrb[0].mxu0
        %v755 = vadd.f32 0.0, %v754
        %v756 = vpop.f32.mrb[0].mxu0
        %757 = vmatprep.mubr.bf16.mxu0 0
        %758 = vmatmul.mubr.bf16.gmra.mrb[0].mxu0 %v650
        %v759 = vpop.f32.mrb[0].mxu0
        %v760 = vadd.f32 0.0, %v759
        %v761 = vpop.f32.mrb[0].mxu0
        %v762 = vpop.f32.mrb[0].mxu0
        %v763 = vadd.f32 0.0, %v762
        %v764 = vpop.f32.mrb[0].mxu0
        %765 = vmatprep.mubr.bf16.mxu0 0
        %766 = vmatmul.mubr.bf16.gmra.mrb[0].mxu0 %v651
        %v767 = vpop.f32.mrb[0].mxu0
        %v768 = vadd.f32 0.0, %v767
        %v769 = vpop.f32.mrb[0].mxu0
        %v770 = vpop.f32.mrb[0].mxu0
        %v771 = vpop.f32.mrb[0].mxu0
        %772 = vdwg.mxu0
        %v773 = vld [vmem:[#allocation3] sm:$0xff]
        %v774 = vld [vmem:[#allocation3 + $0x8] sm:$0xff]
        %v775 = vld [vmem:[#allocation3 + $0x10] sm:$0xff]
        %v776 = vld [vmem:[#allocation3 + $0x18] sm:$0xff]
        %v777 = vld [vmem:[#allocation3 + $0x20] sm:$0xff]
        %v778 = vadd.f32 %v773, %v752
        %v779 = vadd.f32 %v774, %v755
        %v780 = vadd.f32 %v775, %v760
        %v781 = vadd.f32 %v776, %v763
        %v782 = vadd.f32 %v777, %v768
        %783 = vst [vmem:[#allocation3] sm:$0xff] %v778
        %784 = vst [vmem:[#allocation3 + $0x8] sm:$0xff] %v779
        %785 = vst [vmem:[#allocation3 + $0x10] sm:$0xff] %v780
        %786 = vst [vmem:[#allocation3 + $0x18] sm:$0xff] %v781
        %787 = vst [vmem:[#allocation3 + $0x20] sm:$0xff] %v782
        %s788 = scalar_lea.vmem [#allocation2], 2
        %v789 = vld [vmem:[%s788] ss:$2 sm:$0xff]
        %s790 = scalar_lea.vmem [#allocation2], 18
        %v791 = vld [vmem:[%s790] ss:$2 sm:$0xff]
        %s792 = scalar_lea.vmem [#allocation2], 34
        %v793 = vld [vmem:[%s792] ss:$2 sm:$0xff]
        %s794 = scalar_lea.vmem [#allocation2], 50
        %v795 = vld [vmem:[%s794] ss:$2 sm:$0xff]
        %s796 = scalar_lea.vmem [#allocation2], 66
        %v797 = vld [vmem:[%s796] ss:$2 sm:$0xff]
        %v798 = vpack.c.bf16 %v791, %v789
        %v799 = vpack.c.bf16 %v795, %v793
        %v800 = vpack.c.bf16 %v797, %v797
        %s801 = scalar_lea.vmem %s3, 128
        %v802 = vld [vmem:[%s801] sm:$0xf]
        %v803 = vld [vmem:[%s801 + $0x4] sm:$0xf]
        %v804 = vld [vmem:[%s801 + $0x8] sm:$0xf]
        %v805 = vld [vmem:[%s801 + $0xc] sm:$0xf]
        %v806 = vld [vmem:[%s801 + $0x10] sm:$0xf]
        %v807 = vld [vmem:[%s801 + $0x14] sm:$0xf]
        %v808 = vld [vmem:[%s801 + $0x18] sm:$0xf]
        %v809 = vld [vmem:[%s801 + $0x1c] sm:$0xf]
        %v810 = vld [vmem:[%s801 + $0x20] sm:$0xf]
        %v811 = vld [vmem:[%s801 + $0x24] sm:$0xf]
        %v812 = vld [vmem:[%s801 + $0x28] sm:$0xf]
        %v813 = vld [vmem:[%s801 + $0x2c] sm:$0xf]
        %v814 = vld [vmem:[%s801 + $0x30] sm:$0xf]
        %v815 = vld [vmem:[%s801 + $0x34] sm:$0xf]
        %v816 = vld [vmem:[%s801 + $0x38] sm:$0xf]
        %v817 = vld [vmem:[%s801 + $0x3c] sm:$0xf]
        %v834 = vunpack.c.l.b16 %v802
        %v835 = vunpack.c.l.b16 %v803
        %v836 = vunpack.c.l.b16 %v804
        %v837 = vunpack.c.l.b16 %v805
        %v838 = vunpack.c.l.b16 %v806
        %v839 = vunpack.c.l.b16 %v807
        %v840 = vunpack.c.l.b16 %v808
        %v841 = vunpack.c.l.b16 %v809
        %v842 = vunpack.c.l.b16 %v810
        %v843 = vunpack.c.l.b16 %v811
        %v844 = vunpack.c.l.b16 %v812
        %v845 = vunpack.c.l.b16 %v813
        %v846 = vunpack.c.l.b16 %v814
        %v847 = vunpack.c.l.b16 %v815
        %v848 = vunpack.c.l.b16 %v816
        %v849 = vunpack.c.l.b16 %v817
        %v850 = vpack.c.b16 %v835, %v834
        %v851 = vpack.c.b16 %v837, %v836
        %v852 = vpack.c.b16 %v839, %v838
        %v853 = vpack.c.b16 %v841, %v840
        %v854 = vpack.c.b16 %v843, %v842
        %v855 = vpack.c.b16 %v845, %v844
        %v856 = vpack.c.b16 %v847, %v846
        %v857 = vpack.c.b16 %v849, %v848
        %866 = vmatprep.subr.bf16.mxu0 0
        %867 = vmatpush1.bf16.msra.mxu0 %v850
        %868 = vmatprep.subr.bf16.mxu0 0
        %869 = vmatpush1.bf16.msra.mxu0 %v851
        %870 = vmatprep.subr.bf16.mxu0 0
        %871 = vmatpush1.bf16.msra.mxu0 %v852
        %872 = vmatprep.subr.bf16.mxu0 0
        %873 = vmatpush1.bf16.msra.mxu0 %v853
        %874 = vmatprep.subr.bf16.mxu0 0
        %875 = vmatpush1.bf16.msra.mxu0 %v854
        %876 = vmatprep.subr.bf16.mxu0 0
        %877 = vmatpush1.bf16.msra.mxu0 %v855
        %878 = vmatprep.subr.bf16.mxu0 0
        %879 = vmatpush1.bf16.msra.mxu0 %v856
        %880 = vmatprep.subr.bf16.mxu0 0
        %881 = vmatpush1.bf16.msra.mxu0 %v857
        %882 = vmatprep.subr.bf16.mxu0 0
        %883 = vmatpush1.bf16.msra.mxu0 0
        %884 = vmatprep.subr.bf16.mxu0 0
        %885 = vmatpush1.bf16.msra.mxu0 0
        %886 = vmatprep.subr.bf16.mxu0 0
        %887 = vmatpush1.bf16.msra.mxu0 0
        %888 = vmatprep.subr.bf16.mxu0 0
        %889 = vmatpush1.bf16.msra.mxu0 0
        %890 = vmatprep.subr.bf16.mxu0 0
        %891 = vmatpush1.bf16.msra.mxu0 0
        %892 = vmatprep.subr.bf16.mxu0 0
        %893 = vmatpush1.bf16.msra.mxu0 0
        %894 = vmatprep.subr.bf16.mxu0 0
        %895 = vmatpush1.bf16.msra.mxu0 0
        %896 = vmatprep.subr.bf16.mxu0 0
        %897 = vmatpush1.bf16.msra.mxu0 0
        %898 = vmatprep.mubr.bf16.mxu0 0
        %899 = vmatmul.mubr.bf16.gmra.mrb[0].mxu0 %v798
        %v900 = vpop.f32.mrb[0].mxu0
        %v901 = vadd.f32 0.0, %v900
        %v902 = vpop.f32.mrb[0].mxu0
        %v903 = vpop.f32.mrb[0].mxu0
        %v904 = vadd.f32 0.0, %v903
        %v905 = vpop.f32.mrb[0].mxu0
        %906 = vmatprep.mubr.bf16.mxu0 0
        %907 = vmatmul.mubr.bf16.gmra.mrb[0].mxu0 %v799
        %v908 = vpop.f32.mrb[0].mxu0
        %v909 = vadd.f32 0.0, %v908
        %v910 = vpop.f32.mrb[0].mxu0
        %v911 = vpop.f32.mrb[0].mxu0
        %v912 = vadd.f32 0.0, %v911
        %v913 = vpop.f32.mrb[0].mxu0
        %914 = vmatprep.mubr.bf16.mxu0 0
        %915 = vmatmul.mubr.bf16.gmra.mrb[0].mxu0 %v800
        %v916 = vpop.f32.mrb[0].mxu0
        %v917 = vadd.f32 0.0, %v916
        %v918 = vpop.f32.mrb[0].mxu0
        %v919 = vpop.f32.mrb[0].mxu0
        %v920 = vpop.f32.mrb[0].mxu0
        %921 = vdwg.mxu0
        %v922 = vld [vmem:[#allocation3] sm:$0xff]
        %v923 = vld [vmem:[#allocation3 + $0x8] sm:$0xff]
        %v924 = vld [vmem:[#allocation3 + $0x10] sm:$0xff]
        %v925 = vld [vmem:[#allocation3 + $0x18] sm:$0xff]
        %v926 = vld [vmem:[#allocation3 + $0x20] sm:$0xff]
        %v927 = vadd.f32 %v922, %v901
        %v928 = vadd.f32 %v923, %v904
        %v929 = vadd.f32 %v924, %v909
        %v930 = vadd.f32 %v925, %v912
        %v931 = vadd.f32 %v926, %v917
        %932 = vst [vmem:[#allocation3] sm:$0xff] %v927
        %933 = vst [vmem:[#allocation3 + $0x8] sm:$0xff] %v928
        %934 = vst [vmem:[#allocation3 + $0x10] sm:$0xff] %v929
        %935 = vst [vmem:[#allocation3 + $0x18] sm:$0xff] %v930
        %936 = vst [vmem:[#allocation3 + $0x20] sm:$0xff] %v931
        %s937 = scalar_lea.vmem [#allocation2], 10
        %v938 = vld [vmem:[%s937] ss:$2 sm:$0xff]
        %s939 = scalar_lea.vmem [#allocation2], 26
        %v940 = vld [vmem:[%s939] ss:$2 sm:$0xff]
        %s941 = scalar_lea.vmem [#allocation2], 42
        %v942 = vld [vmem:[%s941] ss:$2 sm:$0xff]
        %s943 = scalar_lea.vmem [#allocation2], 58
        %v944 = vld [vmem:[%s943] ss:$2 sm:$0xff]
        %s945 = scalar_lea.vmem [#allocation2], 74
        %v946 = vld [vmem:[%s945] ss:$2 sm:$0xff]
        %v947 = vpack.c.bf16 %v940, %v938
        %v948 = vpack.c.bf16 %v944, %v942
        %v949 = vpack.c.bf16 %v946, %v946
        %s950 = scalar_lea.vmem %s3, 192
        %v951 = vld [vmem:[%s950] sm:$0xf]
        %v952 = vld [vmem:[%s950 + $0x4] sm:$0xf]
        %v953 = vld [vmem:[%s950 + $0x8] sm:$0xf]
        %v954 = vld [vmem:[%s950 + $0xc] sm:$0xf]
        %v955 = vld [vmem:[%s950 + $0x10] sm:$0xf]
        %v956 = vld [vmem:[%s950 + $0x14] sm:$0xf]
        %v957 = vld [vmem:[%s950 + $0x18] sm:$0xf]
        %v958 = vld [vmem:[%s950 + $0x1c] sm:$0xf]
        %v959 = vld [vmem:[%s950 + $0x20] sm:$0xf]
        %v960 = vld [vmem:[%s950 + $0x24] sm:$0xf]
        %v961 = vld [vmem:[%s950 + $0x28] sm:$0xf]
        %v962 = vld [vmem:[%s950 + $0x2c] sm:$0xf]
        %v963 = vld [vmem:[%s950 + $0x30] sm:$0xf]
        %v964 = vld [vmem:[%s950 + $0x34] sm:$0xf]
        %v965 = vld [vmem:[%s950 + $0x38] sm:$0xf]
        %v966 = vld [vmem:[%s950 + $0x3c] sm:$0xf]
        %v983 = vunpack.c.l.b16 %v951
        %v984 = vunpack.c.l.b16 %v952
        %v985 = vunpack.c.l.b16 %v953
        %v986 = vunpack.c.l.b16 %v954
        %v987 = vunpack.c.l.b16 %v955
        %v988 = vunpack.c.l.b16 %v956
        %v989 = vunpack.c.l.b16 %v957
        %v990 = vunpack.c.l.b16 %v958
        %v991 = vunpack.c.l.b16 %v959
        %v992 = vunpack.c.l.b16 %v960
        %v993 = vunpack.c.l.b16 %v961
        %v994 = vunpack.c.l.b16 %v962
        %v995 = vunpack.c.l.b16 %v963
        %v996 = vunpack.c.l.b16 %v964
        %v997 = vunpack.c.l.b16 %v965
        %v998 = vunpack.c.l.b16 %v966
        %v999 = vpack.c.b16 %v984, %v983
        %v1000 = vpack.c.b16 %v986, %v985
        %v1001 = vpack.c.b16 %v988, %v987
        %v1002 = vpack.c.b16 %v990, %v989
        %v1003 = vpack.c.b16 %v992, %v991
        %v1004 = vpack.c.b16 %v994, %v993
        %v1005 = vpack.c.b16 %v996, %v995
        %v1006 = vpack.c.b16 %v998, %v997
        %1015 = vmatprep.subr.bf16.mxu0 0
        %1016 = vmatpush1.bf16.msra.mxu0 %v999
        %1017 = vmatprep.subr.bf16.mxu0 0
        %1018 = vmatpush1.bf16.msra.mxu0 %v1000
        %1019 = vmatprep.subr.bf16.mxu0 0
        %1020 = vmatpush1.bf16.msra.mxu0 %v1001
        %1021 = vmatprep.subr.bf16.mxu0 0
        %1022 = vmatpush1.bf16.msra.mxu0 %v1002
        %1023 = vmatprep.subr.bf16.mxu0 0
        %1024 = vmatpush1.bf16.msra.mxu0 %v1003
        %1025 = vmatprep.subr.bf16.mxu0 0
        %1026 = vmatpush1.bf16.msra.mxu0 %v1004
        %1027 = vmatprep.subr.bf16.mxu0 0
        %1028 = vmatpush1.bf16.msra.mxu0 %v1005
        %1029 = vmatprep.subr.bf16.mxu0 0
        %1030 = vmatpush1.bf16.msra.mxu0 %v1006
        %1031 = vmatprep.subr.bf16.mxu0 0
        %1032 = vmatpush1.bf16.msra.mxu0 0
        %1033 = vmatprep.subr.bf16.mxu0 0
        %1034 = vmatpush1.bf16.msra.mxu0 0
        %1035 = vmatprep.subr.bf16.mxu0 0
        %1036 = vmatpush1.bf16.msra.mxu0 0
        %1037 = vmatprep.subr.bf16.mxu0 0
        %1038 = vmatpush1.bf16.msra.mxu0 0
        %1039 = vmatprep.subr.bf16.mxu0 0
        %1040 = vmatpush1.bf16.msra.mxu0 0
        %1041 = vmatprep.subr.bf16.mxu0 0
        %1042 = vmatpush1.bf16.msra.mxu0 0
        %1043 = vmatprep.subr.bf16.mxu0 0
        %1044 = vmatpush1.bf16.msra.mxu0 0
        %1045 = vmatprep.subr.bf16.mxu0 0
        %1046 = vmatpush1.bf16.msra.mxu0 0
        %1047 = vmatprep.mubr.bf16.mxu0 0
        %1048 = vmatmul.mubr.bf16.gmra.mrb[0].mxu0 %v947
        %v1049 = vpop.f32.mrb[0].mxu0
        %v1050 = vadd.f32 0.0, %v1049
        %v1051 = vpop.f32.mrb[0].mxu0
        %v1052 = vpop.f32.mrb[0].mxu0
        %v1053 = vadd.f32 0.0, %v1052
        %v1054 = vpop.f32.mrb[0].mxu0
        %1055 = vmatprep.mubr.bf16.mxu0 0
        %1056 = vmatmul.mubr.bf16.gmra.mrb[0].mxu0 %v948
        %v1057 = vpop.f32.mrb[0].mxu0
        %v1058 = vadd.f32 0.0, %v1057
        %v1059 = vpop.f32.mrb[0].mxu0
        %v1060 = vpop.f32.mrb[0].mxu0
        %v1061 = vadd.f32 0.0, %v1060
        %v1062 = vpop.f32.mrb[0].mxu0
        %1063 = vmatprep.mubr.bf16.mxu0 0
        %1064 = vmatmul.mubr.bf16.gmra.mrb[0].mxu0 %v949
        %v1065 = vpop.f32.mrb[0].mxu0
        %v1066 = vadd.f32 0.0, %v1065
        %v1067 = vpop.f32.mrb[0].mxu0
        %v1068 = vpop.f32.mrb[0].mxu0
        %v1069 = vpop.f32.mrb[0].mxu0
        %1070 = vdwg.mxu0
        %v1071 = vld [vmem:[#allocation3] sm:$0xff]
        %v1072 = vld [vmem:[#allocation3 + $0x8] sm:$0xff]
        %v1073 = vld [vmem:[#allocation3 + $0x10] sm:$0xff]
        %v1074 = vld [vmem:[#allocation3 + $0x18] sm:$0xff]
        %v1075 = vld [vmem:[#allocation3 + $0x20] sm:$0xff]
        %v1076 = vadd.f32 %v1071, %v1050
        %v1077 = vadd.f32 %v1072, %v1053
        %v1078 = vadd.f32 %v1073, %v1058
        %v1079 = vadd.f32 %v1074, %v1061
        %v1080 = vadd.f32 %v1075, %v1066
        %1081 = vst [vmem:[#allocation3] sm:$0xff] %v1076
        %1082 = vst [vmem:[#allocation3 + $0x8] sm:$0xff] %v1077
        %1083 = vst [vmem:[#allocation3 + $0x10] sm:$0xff] %v1078
        %1084 = vst [vmem:[#allocation3 + $0x18] sm:$0xff] %v1079
        %1085 = vst [vmem:[#allocation3 + $0x20] sm:$0xff] %v1080
        %s1086 = scalar_lea.vmem [#allocation2], 11
        %v1087 = vld [vmem:[%s1086] ss:$2 sm:$0xff]
        %s1088 = scalar_lea.vmem [#allocation2], 27
        %v1089 = vld [vmem:[%s1088] ss:$2 sm:$0xff]
        %s1090 = scalar_lea.vmem [#allocation2], 43
        %v1091 = vld [vmem:[%s1090] ss:$2 sm:$0xff]
        %s1092 = scalar_lea.vmem [#allocation2], 59
        %v1093 = vld [vmem:[%s1092] ss:$2 sm:$0xff]
        %s1094 = scalar_lea.vmem [#allocation2], 75
        %v1095 = vld [vmem:[%s1094] ss:$2 sm:$0xff]
        %v1096 = vpack.c.bf16 %v1089, %v1087
        %v1097 = vpack.c.bf16 %v1093, %v1091
        %v1098 = vpack.c.bf16 %v1095, %v1095
        %s1099 = scalar_lea.vmem %s3, 256
        %v1100 = vld [vmem:[%s1099] sm:$0xf]
        %v1101 = vld [vmem:[%s1099 + $0x4] sm:$0xf]
        %v1102 = vld [vmem:[%s1099 + $0x8] sm:$0xf]
        %v1103 = vld [vmem:[%s1099 + $0xc] sm:$0xf]
        %v1104 = vld [vmem:[%s1099 + $0x10] sm:$0xf]
        %v1105 = vld [vmem:[%s1099 + $0x14] sm:$0xf]
        %v1106 = vld [vmem:[%s1099 + $0x18] sm:$0xf]
        %v1107 = vld [vmem:[%s1099 + $0x1c] sm:$0xf]
        %v1108 = vld [vmem:[%s1099 + $0x20] sm:$0xf]
        %v1109 = vld [vmem:[%s1099 + $0x24] sm:$0xf]
        %v1110 = vld [vmem:[%s1099 + $0x28] sm:$0xf]
        %v1111 = vld [vmem:[%s1099 + $0x2c] sm:$0xf]
        %v1112 = vld [vmem:[%s1099 + $0x30] sm:$0xf]
        %v1113 = vld [vmem:[%s1099 + $0x34] sm:$0xf]
        %v1114 = vld [vmem:[%s1099 + $0x38] sm:$0xf]
        %v1115 = vld [vmem:[%s1099 + $0x3c] sm:$0xf]
        %v1132 = vunpack.c.l.b16 %v1100
        %v1133 = vunpack.c.l.b16 %v1101
        %v1134 = vunpack.c.l.b16 %v1102
        %v1135 = vunpack.c.l.b16 %v1103
        %v1136 = vunpack.c.l.b16 %v1104
        %v1137 = vunpack.c.l.b16 %v1105
        %v1138 = vunpack.c.l.b16 %v1106
        %v1139 = vunpack.c.l.b16 %v1107
        %v1140 = vunpack.c.l.b16 %v1108
        %v1141 = vunpack.c.l.b16 %v1109
        %v1142 = vunpack.c.l.b16 %v1110
        %v1143 = vunpack.c.l.b16 %v1111
        %v1144 = vunpack.c.l.b16 %v1112
        %v1145 = vunpack.c.l.b16 %v1113
        %v1146 = vunpack.c.l.b16 %v1114
        %v1147 = vunpack.c.l.b16 %v1115
        %v1148 = vpack.c.b16 %v1133, %v1132
        %v1149 = vpack.c.b16 %v1135, %v1134
        %v1150 = vpack.c.b16 %v1137, %v1136
        %v1151 = vpack.c.b16 %v1139, %v1138
        %v1152 = vpack.c.b16 %v1141, %v1140
        %v1153 = vpack.c.b16 %v1143, %v1142
        %v1154 = vpack.c.b16 %v1145, %v1144
        %v1155 = vpack.c.b16 %v1147, %v1146
        %1164 = vmatprep.subr.bf16.mxu0 0
        %1165 = vmatpush1.bf16.msra.mxu0 %v1148
        %1166 = vmatprep.subr.bf16.mxu0 0
        %1167 = vmatpush1.bf16.msra.mxu0 %v1149
        %1168 = vmatprep.subr.bf16.mxu0 0
        %1169 = vmatpush1.bf16.msra.mxu0 %v1150
        %1170 = vmatprep.subr.bf16.mxu0 0
        %1171 = vmatpush1.bf16.msra.mxu0 %v1151
        %1172 = vmatprep.subr.bf16.mxu0 0
        %1173 = vmatpush1.bf16.msra.mxu0 %v1152
        %1174 = vmatprep.subr.bf16.mxu0 0
        %1175 = vmatpush1.bf16.msra.mxu0 %v1153
        %1176 = vmatprep.subr.bf16.mxu0 0
        %1177 = vmatpush1.bf16.msra.mxu0 %v1154
        %1178 = vmatprep.subr.bf16.mxu0 0
        %1179 = vmatpush1.bf16.msra.mxu0 %v1155
        %1180 = vmatprep.subr.bf16.mxu0 0
        %1181 = vmatpush1.bf16.msra.mxu0 0
        %1182 = vmatprep.subr.bf16.mxu0 0
        %1183 = vmatpush1.bf16.msra.mxu0 0
        %1184 = vmatprep.subr.bf16.mxu0 0
        %1185 = vmatpush1.bf16.msra.mxu0 0
        %1186 = vmatprep.subr.bf16.mxu0 0
        %1187 = vmatpush1.bf16.msra.mxu0 0
        %1188 = vmatprep.subr.bf16.mxu0 0
        %1189 = vmatpush1.bf16.msra.mxu0 0
        %1190 = vmatprep.subr.bf16.mxu0 0
        %1191 = vmatpush1.bf16.msra.mxu0 0
        %1192 = vmatprep.subr.bf16.mxu0 0
        %1193 = vmatpush1.bf16.msra.mxu0 0
        %1194 = vmatprep.subr.bf16.mxu0 0
        %1195 = vmatpush1.bf16.msra.mxu0 0
        %1196 = vmatprep.mubr.bf16.mxu0 0
        %1197 = vmatmul.mubr.bf16.gmra.mrb[0].mxu0 %v1096
        %v1198 = vpop.f32.mrb[0].mxu0
        %v1199 = vadd.f32 0.0, %v1198
        %v1200 = vpop.f32.mrb[0].mxu0
        %v1201 = vpop.f32.mrb[0].mxu0
        %v1202 = vadd.f32 0.0, %v1201
        %v1203 = vpop.f32.mrb[0].mxu0
        %1204 = vmatprep.mubr.bf16.mxu0 0
        %1205 = vmatmul.mubr.bf16.gmra.mrb[0].mxu0 %v1097
        %v1206 = vpop.f32.mrb[0].mxu0
        %v1207 = vadd.f32 0.0, %v1206
        %v1208 = vpop.f32.mrb[0].mxu0
        %v1209 = vpop.f32.mrb[0].mxu0
        %v1210 = vadd.f32 0.0, %v1209
        %v1211 = vpop.f32.mrb[0].mxu0
        %1212 = vmatprep.mubr.bf16.mxu0 0
        %1213 = vmatmul.mubr.bf16.gmra.mrb[0].mxu0 %v1098
        %v1214 = vpop.f32.mrb[0].mxu0
        %v1215 = vadd.f32 0.0, %v1214
        %v1216 = vpop.f32.mrb[0].mxu0
        %v1217 = vpop.f32.mrb[0].mxu0
        %v1218 = vpop.f32.mrb[0].mxu0
        %1219 = vdwg.mxu0
        %v1220 = vld [vmem:[#allocation3] sm:$0xff]
        %v1221 = vld [vmem:[#allocation3 + $0x8] sm:$0xff]
        %v1222 = vld [vmem:[#allocation3 + $0x10] sm:$0xff]
        %v1223 = vld [vmem:[#allocation3 + $0x18] sm:$0xff]
        %v1224 = vld [vmem:[#allocation3 + $0x20] sm:$0xff]
        %v1225 = vadd.f32 %v1220, %v1199
        %v1226 = vadd.f32 %v1221, %v1202
        %v1227 = vadd.f32 %v1222, %v1207
        %v1228 = vadd.f32 %v1223, %v1210
        %v1229 = vadd.f32 %v1224, %v1215
        %1230 = vst [vmem:[#allocation3] sm:$0xff] %v1225
        %1231 = vst [vmem:[#allocation3 + $0x8] sm:$0xff] %v1226
        %1232 = vst [vmem:[#allocation3 + $0x10] sm:$0xff] %v1227
        %1233 = vst [vmem:[#allocation3 + $0x18] sm:$0xff] %v1228
        %1234 = vst [vmem:[#allocation3 + $0x20] sm:$0xff] %v1229
        %s1235 = scalar_lea.vmem [#allocation2], 12
        %v1236 = vld [vmem:[%s1235] ss:$2 sm:$0xff]
        %s1237 = scalar_lea.vmem [#allocation2], 28
        %v1238 = vld [vmem:[%s1237] ss:$2 sm:$0xff]
        %s1239 = scalar_lea.vmem [#allocation2], 44
        %v1240 = vld [vmem:[%s1239] ss:$2 sm:$0xff]
        %s1241 = scalar_lea.vmem [#allocation2], 60
        %v1242 = vld [vmem:[%s1241] ss:$2 sm:$0xff]
        %s1243 = scalar_lea.vmem [#allocation2], 76
        %v1244 = vld [vmem:[%s1243] ss:$2 sm:$0xff]
        %v1245 = vpack.c.bf16 %v1238, %v1236
        %v1246 = vpack.c.bf16 %v1242, %v1240
        %v1247 = vpack.c.bf16 %v1244, %v1244
        %s1248 = scalar_lea.vmem %s3, 320
        %v1249 = vld [vmem:[%s1248] sm:$0xf]
        %v1250 = vld [vmem:[%s1248 + $0x4] sm:$0xf]
        %v1251 = vld [vmem:[%s1248 + $0x8] sm:$0xf]
        %v1252 = vld [vmem:[%s1248 + $0xc] sm:$0xf]
        %v1253 = vld [vmem:[%s1248 + $0x10] sm:$0xf]
        %v1254 = vld [vmem:[%s1248 + $0x14] sm:$0xf]
        %v1255 = vld [vmem:[%s1248 + $0x18] sm:$0xf]
        %v1256 = vld [vmem:[%s1248 + $0x1c] sm:$0xf]
        %v1257 = vld [vmem:[%s1248 + $0x20] sm:$0xf]
        %v1258 = vld [vmem:[%s1248 + $0x24] sm:$0xf]
        %v1259 = vld [vmem:[%s1248 + $0x28] sm:$0xf]
        %v1260 = vld [vmem:[%s1248 + $0x2c] sm:$0xf]
        %v1261 = vld [vmem:[%s1248 + $0x30] sm:$0xf]
        %v1262 = vld [vmem:[%s1248 + $0x34] sm:$0xf]
        %v1263 = vld [vmem:[%s1248 + $0x38] sm:$0xf]
        %v1264 = vld [vmem:[%s1248 + $0x3c] sm:$0xf]
        %v1281 = vunpack.c.l.b16 %v1249
        %v1282 = vunpack.c.l.b16 %v1250
        %v1283 = vunpack.c.l.b16 %v1251
        %v1284 = vunpack.c.l.b16 %v1252
        %v1285 = vunpack.c.l.b16 %v1253
        %v1286 = vunpack.c.l.b16 %v1254
        %v1287 = vunpack.c.l.b16 %v1255
        %v1288 = vunpack.c.l.b16 %v1256
        %v1289 = vunpack.c.l.b16 %v1257
        %v1290 = vunpack.c.l.b16 %v1258
        %v1291 = vunpack.c.l.b16 %v1259
        %v1292 = vunpack.c.l.b16 %v1260
        %v1293 = vunpack.c.l.b16 %v1261
        %v1294 = vunpack.c.l.b16 %v1262
        %v1295 = vunpack.c.l.b16 %v1263
        %v1296 = vunpack.c.l.b16 %v1264
        %v1297 = vpack.c.b16 %v1282, %v1281
        %v1298 = vpack.c.b16 %v1284, %v1283
        %v1299 = vpack.c.b16 %v1286, %v1285
        %v1300 = vpack.c.b16 %v1288, %v1287
        %v1301 = vpack.c.b16 %v1290, %v1289
        %v1302 = vpack.c.b16 %v1292, %v1291
        %v1303 = vpack.c.b16 %v1294, %v1293
        %v1304 = vpack.c.b16 %v1296, %v1295
        %1313 = vmatprep.subr.bf16.mxu0 0
        %1314 = vmatpush1.bf16.msra.mxu0 %v1297
        %1315 = vmatprep.subr.bf16.mxu0 0
        %1316 = vmatpush1.bf16.msra.mxu0 %v1298
        %1317 = vmatprep.subr.bf16.mxu0 0
        %1318 = vmatpush1.bf16.msra.mxu0 %v1299
        %1319 = vmatprep.subr.bf16.mxu0 0
        %1320 = vmatpush1.bf16.msra.mxu0 %v1300
        %1321 = vmatprep.subr.bf16.mxu0 0
        %1322 = vmatpush1.bf16.msra.mxu0 %v1301
        %1323 = vmatprep.subr.bf16.mxu0 0
        %1324 = vmatpush1.bf16.msra.mxu0 %v1302
        %1325 = vmatprep.subr.bf16.mxu0 0
        %1326 = vmatpush1.bf16.msra.mxu0 %v1303
        %1327 = vmatprep.subr.bf16.mxu0 0
        %1328 = vmatpush1.bf16.msra.mxu0 %v1304
        %1329 = vmatprep.subr.bf16.mxu0 0
        %1330 = vmatpush1.bf16.msra.mxu0 0
        %1331 = vmatprep.subr.bf16.mxu0 0
        %1332 = vmatpush1.bf16.msra.mxu0 0
        %1333 = vmatprep.subr.bf16.mxu0 0
        %1334 = vmatpush1.bf16.msra.mxu0 0
        %1335 = vmatprep.subr.bf16.mxu0 0
        %1336 = vmatpush1.bf16.msra.mxu0 0
        %1337 = vmatprep.subr.bf16.mxu0 0
        %1338 = vmatpush1.bf16.msra.mxu0 0
        %1339 = vmatprep.subr.bf16.mxu0 0
        %1340 = vmatpush1.bf16.msra.mxu0 0
        %1341 = vmatprep.subr.bf16.mxu0 0
        %1342 = vmatpush1.bf16.msra.mxu0 0
        %1343 = vmatprep.subr.bf16.mxu0 0
        %1344 = vmatpush1.bf16.msra.mxu0 0
        %1345 = vmatprep.mubr.bf16.mxu0 0
        %1346 = vmatmul.mubr.bf16.gmra.mrb[0].mxu0 %v1245
        %v1347 = vpop.f32.mrb[0].mxu0
        %v1348 = vadd.f32 0.0, %v1347
        %v1349 = vpop.f32.mrb[0].mxu0
        %v1350 = vpop.f32.mrb[0].mxu0
        %v1351 = vadd.f32 0.0, %v1350
        %v1352 = vpop.f32.mrb[0].mxu0
        %1353 = vmatprep.mubr.bf16.mxu0 0
        %1354 = vmatmul.mubr.bf16.gmra.mrb[0].mxu0 %v1246
        %v1355 = vpop.f32.mrb[0].mxu0
        %v1356 = vadd.f32 0.0, %v1355
        %v1357 = vpop.f32.mrb[0].mxu0
        %v1358 = vpop.f32.mrb[0].mxu0
        %v1359 = vadd.f32 0.0, %v1358
        %v1360 = vpop.f32.mrb[0].mxu0
        %1361 = vmatprep.mubr.bf16.mxu0 0
        %1362 = vmatmul.mubr.bf16.gmra.mrb[0].mxu0 %v1247
        %v1363 = vpop.f32.mrb[0].mxu0
        %v1364 = vadd.f32 0.0, %v1363
        %v1365 = vpop.f32.mrb[0].mxu0
        %v1366 = vpop.f32.mrb[0].mxu0
        %v1367 = vpop.f32.mrb[0].mxu0
        %1368 = vdwg.mxu0
        %v1369 = vld [vmem:[#allocation3] sm:$0xff]
        %v1370 = vld [vmem:[#allocation3 + $0x8] sm:$0xff]
        %v1371 = vld [vmem:[#allocation3 + $0x10] sm:$0xff]
        %v1372 = vld [vmem:[#allocation3 + $0x18] sm:$0xff]
        %v1373 = vld [vmem:[#allocation3 + $0x20] sm:$0xff]
        %v1374 = vadd.f32 %v1369, %v1348
        %v1375 = vadd.f32 %v1370, %v1351
        %v1376 = vadd.f32 %v1371, %v1356
        %v1377 = vadd.f32 %v1372, %v1359
        %v1378 = vadd.f32 %v1373, %v1364
        %1379 = vst [vmem:[#allocation3] sm:$0xff] %v1374
        %1380 = vst [vmem:[#allocation3 + $0x8] sm:$0xff] %v1375
        %1381 = vst [vmem:[#allocation3 + $0x10] sm:$0xff] %v1376
        %1382 = vst [vmem:[#allocation3 + $0x18] sm:$0xff] %v1377
        %1383 = vst [vmem:[#allocation3 + $0x20] sm:$0xff] %v1378
        %s1384 = scalar_lea.vmem [#allocation2], 20
        %v1385 = vld [vmem:[%s1384] ss:$2 sm:$0xff]
        %s1386 = scalar_lea.vmem [#allocation2], 36
        %v1387 = vld [vmem:[%s1386] ss:$2 sm:$0xff]
        %s1388 = scalar_lea.vmem [#allocation2], 52
        %v1389 = vld [vmem:[%s1388] ss:$2 sm:$0xff]
        %s1390 = scalar_lea.vmem [#allocation2], 68
        %v1391 = vld [vmem:[%s1390] ss:$2 sm:$0xff]
        %s1392 = scalar_lea.vmem [#allocation2], 84
        %v1393 = vld [vmem:[%s1392] ss:$2 sm:$0xff]
        %v1394 = vpack.c.bf16 %v1387, %v1385
        %v1395 = vpack.c.bf16 %v1391, %v1389
        %v1396 = vpack.c.bf16 %v1393, %v1393
        %s1397 = scalar_lea.vmem %s3, 384
        %v1398 = vld [vmem:[%s1397] sm:$0xf]
        %v1399 = vld [vmem:[%s1397 + $0x4] sm:$0xf]
        %v1400 = vld [vmem:[%s1397 + $0x8] sm:$0xf]
        %v1401 = vld [vmem:[%s1397 + $0xc] sm:$0xf]
        %v1402 = vld [vmem:[%s1397 + $0x10] sm:$0xf]
        %v1403 = vld [vmem:[%s1397 + $0x14] sm:$0xf]
        %v1404 = vld [vmem:[%s1397 + $0x18] sm:$0xf]
        %v1405 = vld [vmem:[%s1397 + $0x1c] sm:$0xf]
        %v1406 = vld [vmem:[%s1397 + $0x20] sm:$0xf]
        %v1407 = vld [vmem:[%s1397 + $0x24] sm:$0xf]
        %v1408 = vld [vmem:[%s1397 + $0x28] sm:$0xf]
        %v1409 = vld [vmem:[%s1397 + $0x2c] sm:$0xf]
        %v1410 = vld [vmem:[%s1397 + $0x30] sm:$0xf]
        %v1411 = vld [vmem:[%s1397 + $0x34] sm:$0xf]
        %v1412 = vld [vmem:[%s1397 + $0x38] sm:$0xf]
        %v1413 = vld [vmem:[%s1397 + $0x3c] sm:$0xf]
        %v1430 = vunpack.c.l.b16 %v1398
        %v1431 = vunpack.c.l.b16 %v1399
        %v1432 = vunpack.c.l.b16 %v1400
        %v1433 = vunpack.c.l.b16 %v1401
        %v1434 = vunpack.c.l.b16 %v1402
        %v1435 = vunpack.c.l.b16 %v1403
        %v1436 = vunpack.c.l.b16 %v1404
        %v1437 = vunpack.c.l.b16 %v1405
        %v1438 = vunpack.c.l.b16 %v1406
        %v1439 = vunpack.c.l.b16 %v1407
        %v1440 = vunpack.c.l.b16 %v1408
        %v1441 = vunpack.c.l.b16 %v1409
        %v1442 = vunpack.c.l.b16 %v1410
        %v1443 = vunpack.c.l.b16 %v1411
        %v1444 = vunpack.c.l.b16 %v1412
        %v1445 = vunpack.c.l.b16 %v1413
        %v1446 = vpack.c.b16 %v1431, %v1430
        %v1447 = vpack.c.b16 %v1433, %v1432
        %v1448 = vpack.c.b16 %v1435, %v1434
        %v1449 = vpack.c.b16 %v1437, %v1436
        %v1450 = vpack.c.b16 %v1439, %v1438
        %v1451 = vpack.c.b16 %v1441, %v1440
        %v1452 = vpack.c.b16 %v1443, %v1442
        %v1453 = vpack.c.b16 %v1445, %v1444
        %1462 = vmatprep.subr.bf16.mxu0 0
        %1463 = vmatpush1.bf16.msra.mxu0 %v1446
        %1464 = vmatprep.subr.bf16.mxu0 0
        %1465 = vmatpush1.bf16.msra.mxu0 %v1447
        %1466 = vmatprep.subr.bf16.mxu0 0
        %1467 = vmatpush1.bf16.msra.mxu0 %v1448
        %1468 = vmatprep.subr.bf16.mxu0 0
        %1469 = vmatpush1.bf16.msra.mxu0 %v1449
        %1470 = vmatprep.subr.bf16.mxu0 0
        %1471 = vmatpush1.bf16.msra.mxu0 %v1450
        %1472 = vmatprep.subr.bf16.mxu0 0
        %1473 = vmatpush1.bf16.msra.mxu0 %v1451
        %1474 = vmatprep.subr.bf16.mxu0 0
        %1475 = vmatpush1.bf16.msra.mxu0 %v1452
        %1476 = vmatprep.subr.bf16.mxu0 0
        %1477 = vmatpush1.bf16.msra.mxu0 %v1453
        %1478 = vmatprep.subr.bf16.mxu0 0
        %1479 = vmatpush1.bf16.msra.mxu0 0
        %1480 = vmatprep.subr.bf16.mxu0 0
        %1481 = vmatpush1.bf16.msra.mxu0 0
        %1482 = vmatprep.subr.bf16.mxu0 0
        %1483 = vmatpush1.bf16.msra.mxu0 0
        %1484 = vmatprep.subr.bf16.mxu0 0
        %1485 = vmatpush1.bf16.msra.mxu0 0
        %1486 = vmatprep.subr.bf16.mxu0 0
        %1487 = vmatpush1.bf16.msra.mxu0 0
        %1488 = vmatprep.subr.bf16.mxu0 0
        %1489 = vmatpush1.bf16.msra.mxu0 0
        %1490 = vmatprep.subr.bf16.mxu0 0
        %1491 = vmatpush1.bf16.msra.mxu0 0
        %1492 = vmatprep.subr.bf16.mxu0 0
        %1493 = vmatpush1.bf16.msra.mxu0 0
        %1494 = vmatprep.mubr.bf16.mxu0 0
        %1495 = vmatmul.mubr.bf16.gmra.mrb[0].mxu0 %v1394
        %v1496 = vpop.f32.mrb[0].mxu0
        %v1497 = vadd.f32 0.0, %v1496
        %v1498 = vpop.f32.mrb[0].mxu0
        %v1499 = vpop.f32.mrb[0].mxu0
        %v1500 = vadd.f32 0.0, %v1499
        %v1501 = vpop.f32.mrb[0].mxu0
        %1502 = vmatprep.mubr.bf16.mxu0 0
        %1503 = vmatmul.mubr.bf16.gmra.mrb[0].mxu0 %v1395
        %v1504 = vpop.f32.mrb[0].mxu0
        %v1505 = vadd.f32 0.0, %v1504
        %v1506 = vpop.f32.mrb[0].mxu0
        %v1507 = vpop.f32.mrb[0].mxu0
        %v1508 = vadd.f32 0.0, %v1507
        %v1509 = vpop.f32.mrb[0].mxu0
        %1510 = vmatprep.mubr.bf16.mxu0 0
        %1511 = vmatmul.mubr.bf16.gmra.mrb[0].mxu0 %v1396
        %v1512 = vpop.f32.mrb[0].mxu0
        %v1513 = vadd.f32 0.0, %v1512
        %v1514 = vpop.f32.mrb[0].mxu0
        %v1515 = vpop.f32.mrb[0].mxu0
        %v1516 = vpop.f32.mrb[0].mxu0
        %1517 = vdwg.mxu0
        %v1518 = vld [vmem:[#allocation3] sm:$0xff]
        %v1519 = vld [vmem:[#allocation3 + $0x8] sm:$0xff]
        %v1520 = vld [vmem:[#allocation3 + $0x10] sm:$0xff]
        %v1521 = vld [vmem:[#allocation3 + $0x18] sm:$0xff]
        %v1522 = vld [vmem:[#allocation3 + $0x20] sm:$0xff]
        %v1523 = vadd.f32 %v1518, %v1497
        %v1524 = vadd.f32 %v1519, %v1500
        %v1525 = vadd.f32 %v1520, %v1505
        %v1526 = vadd.f32 %v1521, %v1508
        %v1527 = vadd.f32 %v1522, %v1513
        %1528 = vst [vmem:[#allocation3] sm:$0xff] %v1523
        %1529 = vst [vmem:[#allocation3 + $0x8] sm:$0xff] %v1524
        %1530 = vst [vmem:[#allocation3 + $0x10] sm:$0xff] %v1525
        %1531 = vst [vmem:[#allocation3 + $0x18] sm:$0xff] %v1526
        %1532 = vst [vmem:[#allocation3 + $0x20] sm:$0xff] %v1527
        %s1533 = scalar_lea.vmem [#allocation2], 21
        %v1534 = vld [vmem:[%s1533] ss:$2 sm:$0xff]
        %s1535 = scalar_lea.vmem [#allocation2], 37
        %v1536 = vld [vmem:[%s1535] ss:$2 sm:$0xff]
        %s1537 = scalar_lea.vmem [#allocation2], 53
        %v1538 = vld [vmem:[%s1537] ss:$2 sm:$0xff]
        %s1539 = scalar_lea.vmem [#allocation2], 69
        %v1540 = vld [vmem:[%s1539] ss:$2 sm:$0xff]
        %s1541 = scalar_lea.vmem [#allocation2], 85
        %v1542 = vld [vmem:[%s1541] ss:$2 sm:$0xff]
        %v1543 = vpack.c.bf16 %v1536, %v1534
        %v1544 = vpack.c.bf16 %v1540, %v1538
        %v1545 = vpack.c.bf16 %v1542, %v1542
        %s1546 = scalar_lea.vmem %s3, 448
        %v1547 = vld [vmem:[%s1546] sm:$0xf]
        %v1548 = vld [vmem:[%s1546 + $0x4] sm:$0xf]
        %v1549 = vld [vmem:[%s1546 + $0x8] sm:$0xf]
        %v1550 = vld [vmem:[%s1546 + $0xc] sm:$0xf]
        %v1551 = vld [vmem:[%s1546 + $0x10] sm:$0xf]
        %v1552 = vld [vmem:[%s1546 + $0x14] sm:$0xf]
        %v1553 = vld [vmem:[%s1546 + $0x18] sm:$0xf]
        %v1554 = vld [vmem:[%s1546 + $0x1c] sm:$0xf]
        %v1555 = vld [vmem:[%s1546 + $0x20] sm:$0xf]
        %v1556 = vld [vmem:[%s1546 + $0x24] sm:$0xf]
        %v1557 = vld [vmem:[%s1546 + $0x28] sm:$0xf]
        %v1558 = vld [vmem:[%s1546 + $0x2c] sm:$0xf]
        %v1559 = vld [vmem:[%s1546 + $0x30] sm:$0xf]
        %v1560 = vld [vmem:[%s1546 + $0x34] sm:$0xf]
        %v1561 = vld [vmem:[%s1546 + $0x38] sm:$0xf]
        %v1562 = vld [vmem:[%s1546 + $0x3c] sm:$0xf]
        %v1579 = vunpack.c.l.b16 %v1547
        %v1580 = vunpack.c.l.b16 %v1548
        %v1581 = vunpack.c.l.b16 %v1549
        %v1582 = vunpack.c.l.b16 %v1550
        %v1583 = vunpack.c.l.b16 %v1551
        %v1584 = vunpack.c.l.b16 %v1552
        %v1585 = vunpack.c.l.b16 %v1553
        %v1586 = vunpack.c.l.b16 %v1554
        %v1587 = vunpack.c.l.b16 %v1555
        %v1588 = vunpack.c.l.b16 %v1556
        %v1589 = vunpack.c.l.b16 %v1557
        %v1590 = vunpack.c.l.b16 %v1558
        %v1591 = vunpack.c.l.b16 %v1559
        %v1592 = vunpack.c.l.b16 %v1560
        %v1593 = vunpack.c.l.b16 %v1561
        %v1594 = vunpack.c.l.b16 %v1562
        %v1595 = vpack.c.b16 %v1580, %v1579
        %v1596 = vpack.c.b16 %v1582, %v1581
        %v1597 = vpack.c.b16 %v1584, %v1583
        %v1598 = vpack.c.b16 %v1586, %v1585
        %v1599 = vpack.c.b16 %v1588, %v1587
        %v1600 = vpack.c.b16 %v1590, %v1589
        %v1601 = vpack.c.b16 %v1592, %v1591
        %v1602 = vpack.c.b16 %v1594, %v1593
        %1611 = vmatprep.subr.bf16.mxu0 0
        %1612 = vmatpush1.bf16.msra.mxu0 %v1595
        %1613 = vmatprep.subr.bf16.mxu0 0
        %1614 = vmatpush1.bf16.msra.mxu0 %v1596
        %1615 = vmatprep.subr.bf16.mxu0 0
        %1616 = vmatpush1.bf16.msra.mxu0 %v1597
        %1617 = vmatprep.subr.bf16.mxu0 0
        %1618 = vmatpush1.bf16.msra.mxu0 %v1598
        %1619 = vmatprep.subr.bf16.mxu0 0
        %1620 = vmatpush1.bf16.msra.mxu0 %v1599
        %1621 = vmatprep.subr.bf16.mxu0 0
        %1622 = vmatpush1.bf16.msra.mxu0 %v1600
        %1623 = vmatprep.subr.bf16.mxu0 0
        %1624 = vmatpush1.bf16.msra.mxu0 %v1601
        %1625 = vmatprep.subr.bf16.mxu0 0
        %1626 = vmatpush1.bf16.msra.mxu0 %v1602
        %1627 = vmatprep.subr.bf16.mxu0 0
        %1628 = vmatpush1.bf16.msra.mxu0 0
        %1629 = vmatprep.subr.bf16.mxu0 0
        %1630 = vmatpush1.bf16.msra.mxu0 0
        %1631 = vmatprep.subr.bf16.mxu0 0
        %1632 = vmatpush1.bf16.msra.mxu0 0
        %1633 = vmatprep.subr.bf16.mxu0 0
        %1634 = vmatpush1.bf16.msra.mxu0 0
        %1635 = vmatprep.subr.bf16.mxu0 0
        %1636 = vmatpush1.bf16.msra.mxu0 0
        %1637 = vmatprep.subr.bf16.mxu0 0
        %1638 = vmatpush1.bf16.msra.mxu0 0
        %1639 = vmatprep.subr.bf16.mxu0 0
        %1640 = vmatpush1.bf16.msra.mxu0 0
        %1641 = vmatprep.subr.bf16.mxu0 0
        %1642 = vmatpush1.bf16.msra.mxu0 0
        %1643 = vmatprep.mubr.bf16.mxu0 0
        %1644 = vmatmul.mubr.bf16.gmra.mrb[0].mxu0 %v1543
        %v1645 = vpop.f32.mrb[0].mxu0
        %v1646 = vadd.f32 0.0, %v1645
        %v1647 = vpop.f32.mrb[0].mxu0
        %v1648 = vpop.f32.mrb[0].mxu0
        %v1649 = vadd.f32 0.0, %v1648
        %v1650 = vpop.f32.mrb[0].mxu0
        %1651 = vmatprep.mubr.bf16.mxu0 0
        %1652 = vmatmul.mubr.bf16.gmra.mrb[0].mxu0 %v1544
        %v1653 = vpop.f32.mrb[0].mxu0
        %v1654 = vadd.f32 0.0, %v1653
        %v1655 = vpop.f32.mrb[0].mxu0
        %v1656 = vpop.f32.mrb[0].mxu0
        %v1657 = vadd.f32 0.0, %v1656
        %v1658 = vpop.f32.mrb[0].mxu0
        %1659 = vmatprep.mubr.bf16.mxu0 0
        %1660 = vmatmul.mubr.bf16.gmra.mrb[0].mxu0 %v1545
        %v1661 = vpop.f32.mrb[0].mxu0
        %v1662 = vadd.f32 0.0, %v1661
        %v1663 = vpop.f32.mrb[0].mxu0
        %v1664 = vpop.f32.mrb[0].mxu0
        %v1665 = vpop.f32.mrb[0].mxu0
        %1666 = vdwg.mxu0
        %v1667 = vld [vmem:[#allocation3] sm:$0xff]
        %v1668 = vld [vmem:[#allocation3 + $0x8] sm:$0xff]
        %v1669 = vld [vmem:[#allocation3 + $0x10] sm:$0xff]
        %v1670 = vld [vmem:[#allocation3 + $0x18] sm:$0xff]
        %v1671 = vld [vmem:[#allocation3 + $0x20] sm:$0xff]
        %v1672 = vadd.f32 %v1667, %v1646
        %v1673 = vadd.f32 %v1668, %v1649
        %v1674 = vadd.f32 %v1669, %v1654
        %v1675 = vadd.f32 %v1670, %v1657
        %v1676 = vadd.f32 %v1671, %v1662
        %1677 = vst [vmem:[#allocation3] sm:$0xff] %v1672
        %1678 = vst [vmem:[#allocation3 + $0x8] sm:$0xff] %v1673
        %1679 = vst [vmem:[#allocation3 + $0x10] sm:$0xff] %v1674
        %1680 = vst [vmem:[#allocation3 + $0x18] sm:$0xff] %v1675
        %1681 = vst [vmem:[#allocation3 + $0x20] sm:$0xff] %v1676
        %s1682 = scalar_lea.vmem [#allocation2], 22
        %v1683 = vld [vmem:[%s1682] ss:$2 sm:$0xff]
        %s1684 = scalar_lea.vmem [#allocation2], 38
        %v1685 = vld [vmem:[%s1684] ss:$2 sm:$0xff]
        %s1686 = scalar_lea.vmem [#allocation2], 54
        %v1687 = vld [vmem:[%s1686] ss:$2 sm:$0xff]
        %s1688 = scalar_lea.vmem [#allocation2], 70
        %v1689 = vld [vmem:[%s1688] ss:$2 sm:$0xff]
        %s1690 = scalar_lea.vmem [#allocation2], 86
        %v1691 = vld [vmem:[%s1690] ss:$2 sm:$0xff]
        %v1692 = vpack.c.bf16 %v1685, %v1683
        %v1693 = vpack.c.bf16 %v1689, %v1687
        %v1694 = vpack.c.bf16 %v1691, %v1691
        %s1695 = scalar_lea.vmem %s3, 512
        %v1696 = vld [vmem:[%s1695] sm:$0xf]
        %v1697 = vld [vmem:[%s1695 + $0x4] sm:$0xf]
        %v1698 = vld [vmem:[%s1695 + $0x8] sm:$0xf]
        %v1699 = vld [vmem:[%s1695 + $0xc] sm:$0xf]
        %v1700 = vld [vmem:[%s1695 + $0x10] sm:$0xf]
        %v1701 = vld [vmem:[%s1695 + $0x14] sm:$0xf]
        %v1702 = vld [vmem:[%s1695 + $0x18] sm:$0xf]
        %v1703 = vld [vmem:[%s1695 + $0x1c] sm:$0xf]
        %v1704 = vld [vmem:[%s1695 + $0x20] sm:$0xf]
        %v1705 = vld [vmem:[%s1695 + $0x24] sm:$0xf]
        %v1706 = vld [vmem:[%s1695 + $0x28] sm:$0xf]
        %v1707 = vld [vmem:[%s1695 + $0x2c] sm:$0xf]
        %v1708 = vld [vmem:[%s1695 + $0x30] sm:$0xf]
        %v1709 = vld [vmem:[%s1695 + $0x34] sm:$0xf]
        %v1710 = vld [vmem:[%s1695 + $0x38] sm:$0xf]
        %v1711 = vld [vmem:[%s1695 + $0x3c] sm:$0xf]
        %v1728 = vunpack.c.l.b16 %v1696
        %v1729 = vunpack.c.l.b16 %v1697
        %v1730 = vunpack.c.l.b16 %v1698
        %v1731 = vunpack.c.l.b16 %v1699
        %v1732 = vunpack.c.l.b16 %v1700
        %v1733 = vunpack.c.l.b16 %v1701
        %v1734 = vunpack.c.l.b16 %v1702
        %v1735 = vunpack.c.l.b16 %v1703
        %v1736 = vunpack.c.l.b16 %v1704
        %v1737 = vunpack.c.l.b16 %v1705
        %v1738 = vunpack.c.l.b16 %v1706
        %v1739 = vunpack.c.l.b16 %v1707
        %v1740 = vunpack.c.l.b16 %v1708
        %v1741 = vunpack.c.l.b16 %v1709
        %v1742 = vunpack.c.l.b16 %v1710
        %v1743 = vunpack.c.l.b16 %v1711
        %v1744 = vpack.c.b16 %v1729, %v1728
        %v1745 = vpack.c.b16 %v1731, %v1730
        %v1746 = vpack.c.b16 %v1733, %v1732
        %v1747 = vpack.c.b16 %v1735, %v1734
        %v1748 = vpack.c.b16 %v1737, %v1736
        %v1749 = vpack.c.b16 %v1739, %v1738
        %v1750 = vpack.c.b16 %v1741, %v1740
        %v1751 = vpack.c.b16 %v1743, %v1742
        %1760 = vmatprep.subr.bf16.mxu0 0
        %1761 = vmatpush1.bf16.msra.mxu0 %v1744
        %1762 = vmatprep.subr.bf16.mxu0 0
        %1763 = vmatpush1.bf16.msra.mxu0 %v1745
        %1764 = vmatprep.subr.bf16.mxu0 0
        %1765 = vmatpush1.bf16.msra.mxu0 %v1746
        %1766 = vmatprep.subr.bf16.mxu0 0
        %1767 = vmatpush1.bf16.msra.mxu0 %v1747
        %1768 = vmatprep.subr.bf16.mxu0 0
        %1769 = vmatpush1.bf16.msra.mxu0 %v1748
        %1770 = vmatprep.subr.bf16.mxu0 0
        %1771 = vmatpush1.bf16.msra.mxu0 %v1749
        %1772 = vmatprep.subr.bf16.mxu0 0
        %1773 = vmatpush1.bf16.msra.mxu0 %v1750
        %1774 = vmatprep.subr.bf16.mxu0 0
        %1775 = vmatpush1.bf16.msra.mxu0 %v1751
        %1776 = vmatprep.subr.bf16.mxu0 0
        %1777 = vmatpush1.bf16.msra.mxu0 0
        %1778 = vmatprep.subr.bf16.mxu0 0
        %1779 = vmatpush1.bf16.msra.mxu0 0
        %1780 = vmatprep.subr.bf16.mxu0 0
        %1781 = vmatpush1.bf16.msra.mxu0 0
        %1782 = vmatprep.subr.bf16.mxu0 0
        %1783 = vmatpush1.bf16.msra.mxu0 0
        %1784 = vmatprep.subr.bf16.mxu0 0
        %1785 = vmatpush1.bf16.msra.mxu0 0
        %1786 = vmatprep.subr.bf16.mxu0 0
        %1787 = vmatpush1.bf16.msra.mxu0 0
        %1788 = vmatprep.subr.bf16.mxu0 0
        %1789 = vmatpush1.bf16.msra.mxu0 0
        %1790 = vmatprep.subr.bf16.mxu0 0
        %1791 = vmatpush1.bf16.msra.mxu0 0
        %1792 = vmatprep.mubr.bf16.mxu0 0
        %1793 = vmatmul.mubr.bf16.gmra.mrb[0].mxu0 %v1692
        %v1794 = vpop.f32.mrb[0].mxu0
        %v1795 = vadd.f32 0.0, %v1794
        %v1796 = vpop.f32.mrb[0].mxu0
        %v1797 = vpop.f32.mrb[0].mxu0
        %v1798 = vadd.f32 0.0, %v1797
        %v1799 = vpop.f32.mrb[0].mxu0
        %1800 = vmatprep.mubr.bf16.mxu0 0
        %1801 = vmatmul.mubr.bf16.gmra.mrb[0].mxu0 %v1693
        %v1802 = vpop.f32.mrb[0].mxu0
        %v1803 = vadd.f32 0.0, %v1802
        %v1804 = vpop.f32.mrb[0].mxu0
        %v1805 = vpop.f32.mrb[0].mxu0
        %v1806 = vadd.f32 0.0, %v1805
        %v1807 = vpop.f32.mrb[0].mxu0
        %1808 = vmatprep.mubr.bf16.mxu0 0
        %1809 = vmatmul.mubr.bf16.gmra.mrb[0].mxu0 %v1694
        %v1810 = vpop.f32.mrb[0].mxu0
        %v1811 = vadd.f32 0.0, %v1810
        %v1812 = vpop.f32.mrb[0].mxu0
        %v1813 = vpop.f32.mrb[0].mxu0
        %v1814 = vpop.f32.mrb[0].mxu0
        %1815 = vdwg.mxu0
        %v1816 = vld [vmem:[#allocation3] sm:$0xff]
        %v1817 = vld [vmem:[#allocation3 + $0x8] sm:$0xff]
        %v1818 = vld [vmem:[#allocation3 + $0x10] sm:$0xff]
        %v1819 = vld [vmem:[#allocation3 + $0x18] sm:$0xff]
        %v1820 = vld [vmem:[#allocation3 + $0x20] sm:$0xff]
        %v1821 = vadd.f32 %v1816, %v1795
        %v1822 = vadd.f32 %v1817, %v1798
        %v1823 = vadd.f32 %v1818, %v1803
        %v1824 = vadd.f32 %v1819, %v1806
        %v1825 = vadd.f32 %v1820, %v1811
        %1826 = vst [vmem:[#allocation3] sm:$0xff] %v1821
        %1827 = vst [vmem:[#allocation3 + $0x8] sm:$0xff] %v1822
        %1828 = vst [vmem:[#allocation3 + $0x10] sm:$0xff] %v1823
        %1829 = vst [vmem:[#allocation3 + $0x18] sm:$0xff] %v1824
        %1830 = vst [vmem:[#allocation3 + $0x20] sm:$0xff] %v1825
        %v1831 = vld [vmem:[#allocation3] sm:$0xff]
        %v1832 = vld [vmem:[#allocation3 + $0x8] sm:$0xff]
        %v1833 = vld [vmem:[#allocation3 + $0x10] sm:$0xff]
        %v1834 = vld [vmem:[#allocation3 + $0x18] sm:$0xff]
        %v1835 = vld [vmem:[#allocation3 + $0x20] sm:$0xff]
        %v1836 = vld [vmem:[%s4] sm:$0x1]
        %v1838 = vlaneseq
        %v1839 = vshrl.u32 %v1838, 7
        %v1840 = vsub.s32 0, %v1839
        %v1841 = vrot.slane %v1836, %v1840
        %v1843 = vadd.f32 %v1831, %v1841
        %v1844 = vadd.f32 %v1832, %v1841
        %v1845 = vadd.f32 %v1833, %v1841
        %v1846 = vadd.f32 %v1834, %v1841
        %v1847 = vadd.f32 %v1835, %v1841
        %s1848 = sld [smem:[#allocation4 + $0x80]]
        %v1849 = vmax.f32 %v1843, 0.0
        %v1850 = vmax.f32 %v1844, 0.0
        %v1851 = vmax.f32 %v1845, 0.0
        %v1852 = vmax.f32 %v1846, 0.0
        %v1853 = vmax.f32 %v1847, 0.0
        %v1854 = vstv %s1848
        %v1855 = vmin.f32 %v1854, %v1849
        %v1856 = vmin.f32 %v1854, %v1850
        %v1857 = vmin.f32 %v1854, %v1851
        %v1858 = vmin.f32 %v1854, %v1852
        %v1859 = vmin.f32 %v1854, %v1853
        %s1860 = sld [smem:[#allocation4 + $0x81]]
        %v1861 = vstv %s1860
        %v1862 = vmul.f32 %v1855, %v1861
        %v1863 = vmul.f32 %v1856, %v1861
        %v1864 = vmul.f32 %v1857, %v1861
        %v1865 = vmul.f32 %v1858, %v1861
        %v1866 = vmul.f32 %v1859, %v1861
        %v1867 = vround.ne.pseudo %v1862
        %v1868 = vround.ne.pseudo %v1863
        %v1869 = vround.ne.pseudo %v1864
        %v1870 = vround.ne.pseudo %v1865
        %v1871 = vround.ne.pseudo %v1866
        %s1872 = sld [smem:[#allocation4 + $0x82]]
        %v1873 = vstv %s1872
        %v1874 = vmul.f32 %v1867, %v1873
        %v1875 = vmul.f32 %v1868, %v1873
        %v1876 = vmul.f32 %v1869, %v1873
        %v1877 = vmul.f32 %v1870, %v1873
        %v1878 = vmul.f32 %v1871, %v1873
        %v1879 = vpack.c.bf16 %v1875, %v1874
        %v1880 = vpack.c.bf16 %v1877, %v1876
        %v1881 = vpack.c.bf16 %v1878, %v1878
        %v1885 = vunpack.c.l.b16 %v1879
        %v1886 = vunpack.c.h.b16 %v1879
        %v1887 = vunpack.c.l.b16 %v1880
        %v1888 = vunpack.c.h.b16 %v1880
        %v1889 = vunpack.c.l.b16 %v1881
        %v1890 = vpack.c.b16 %v1885, %v1885
        %v1891 = vpack.c.b16 %v1886, %v1886
        %v1892 = vpack.c.b16 %v1887, %v1887
        %v1893 = vpack.c.b16 %v1888, %v1888
        %v1894 = vpack.c.b16 %v1889, %v1889
        %1900 = vst [vmem:[%s265] sm:$0xf] %v1890
        %1901 = vst [vmem:[%s265 + $0x4] sm:$0xf] %v1891
        %1902 = vst [vmem:[%s265 + $0x8] sm:$0xf] %v1892
        %1903 = vst [vmem:[%s265 + $0xc] sm:$0xf] %v1893
        %1904 = vst [vmem:[%s265 + $0x10] sm:$0xf] %v1894
        %p1905 = scmp.lt.s32.totalorder %s18, 1
        %s1906 = scalar_select %p1905, %s18, 1
        %s1907 = smul.addr %s1906, 5
        %s1908 = smul.addr %s1907, 4
        %s1909 = scalar_lea.vmem %s6, %s1908
        // Predicated region
        $region49: #{bottleneck_forward.2} parent=43 // pred_check
          %p1910 = pneg %p167
        $region50: #{bottleneck_forward.2} parent=43 // pred_check_branch
          %1912 = sbr.rel (%p1910) target = $region52
        $region51: #{bottleneck_forward.2} parent=43 // pred_region
          _
        $region52: #{bottleneck_forward.2} parent=43 // pred_fallthru
          _
      $region44: #{bottleneck_forward.2} parent=5 // pred_fallthru
        _
      %p1913 = scmp.le.s32.totalorder 2, %s13
      // Predicated region
      $region53: #{bottleneck_forward.2} parent=5 // pred_check
        %p1914 = pneg %p1913
      $region54: #{bottleneck_forward.2} parent=5 // pred_check_branch
        %1916 = sbr.rel (%p1914) target = $region56
      $region55: #{bottleneck_forward.2} parent=5 // pred_region
        %s1917 = ssub.s32 %s13, 2
        // Predicated region
        $region57: #{bottleneck_forward.2} parent=55 // pred_check
          %p1918 = pneg %p173
        $region58: #{bottleneck_forward.2} parent=55 // pred_check_branch
          %1920 = sbr.rel (%p1918) target = $region60
        $region59: #{bottleneck_forward.2} parent=55 // pred_region
          %p1921 = scmp.lt.s32.totalorder %s19, 1
          %s1922 = scalar_select %p1921, %s19, 1
          %s1923 = smul.addr %s1922, 5
          %s1924 = smul.addr %s1923, 4
          %s1925 = scalar_lea.vmem %s6, %s1924
        $region60: #{bottleneck_forward.2} parent=55 // pred_fallthru
          _
      $region56: #{bottleneck_forward.2} parent=5 // pred_fallthru
        _
    $region6: #{bottleneck_forward.2} parent=1 // loop_footer
      %s17 = sadd.s32 1, %s13
    $region7: #{bottleneck_forward.2} parent=1 // loop_footer_branch
      %12 = sbr.rel target = $region3
    $region8: #{bottleneck_forward.2} parent=1 // loop_exit
      _
    %1926 = vsyncpa [#allocation5], 1
    %s1927 = scalar_lea.sflag [#allocation5], 1
    %1928 = vsyncpa %s1927, 1

</llo_original>
